<compile_context>
chip_gen: v7x
topology: tpu7x:2x2x1
jax: 0.10.0
libtpu: 0.0.40
codegen_flags: <defaults>
</compile_context>

<pallas_src>
import functools
import math
from dataclasses import dataclass

import jax
import jax.numpy as jnp
import numpy as np
from jax import lax
from jax.experimental import pallas as pl
from jax.experimental.pallas import tpu as pltpu


# ----------------------------- config ---------------------------------------


@dataclass
class GPTConfig:
    block_size: int = 8
    vocab_size: int = 128
    n_layer: int = 2
    n_head: int = 4
    n_embd: int = 32
    dropout: float = 0.0
    bias: bool = True
    activation_function: str = "GELU"


# --------------------------- kernel helpers ----------------------------------


def _erf(x):
    # Abramowitz & Stegun 7.1.26 rational approximation, |err| <= 1.5e-7
    # (~f32 eps), built only from ops with guaranteed Mosaic lowerings.
    a1, a2, a3, a4, a5 = (0.254829592, -0.284496736, 1.421413741,
                          -1.453152027, 1.061405429)
    p = 0.3275911
    sign = jnp.where(x < 0.0, -1.0, 1.0)
    ax = jnp.abs(x)
    t = 1.0 / (1.0 + p * ax)
    poly = ((((a5 * t + a4) * t + a3) * t + a2) * t + a1) * t
    return sign * (1.0 - poly * jnp.exp(-ax * ax))


def _gelu_exact(x):
    # matches torch.nn.GELU() (erf-based, approximate='none')
    return 0.5 * x * (1.0 + _erf(x * (1.0 / math.sqrt(2.0))))


def _layernorm(x, w, b, eps=1e-5):
    mu = jnp.mean(x, axis=-1, keepdims=True)
    xc = x - mu
    var = jnp.mean(xc * xc, axis=-1, keepdims=True)
    return xc * lax.rsqrt(var + eps) * w + b


def _mm(a, b):  # (m, k) @ (k, n)
    return lax.dot_general(a, b, (((1,), (0,)), ((), ())),
                           preferred_element_type=jnp.float32)


def _mm_nt(a, b):  # (m, k) @ (n, k)^T
    return lax.dot_general(a, b, (((1,), (1,)), ((), ())),
                           preferred_element_type=jnp.float32)


# ------------------------------ kernel ---------------------------------------


def gpt_kernel(x_ref, bias_ref,
               ln1w_ref, ln1b_ref, wqkv_ref, bqkv_ref, wpr_ref, bpr_ref,
               ln2w_ref, ln2b_ref, wfc_ref, bfc_ref, wmp_ref, bmp_ref,
               lnfw_ref, lnfb_ref, wlm_ref,
               logits_ref, xbuf, *, n_head, batch, seq):
    layer = pl.program_id(0)
    n_layers = pl.num_programs(0)

    @pl.when(layer == 0)
    def _init():
        xbuf[...] = x_ref[...]

    BT, C = xbuf.shape
    B, T = batch, seq
    hd = C // n_head

    # per-layer parameters (leading layer dim selected by the BlockSpec)
    ln1w, ln1b = ln1w_ref[0, 0], ln1b_ref[0, 0]
    ln2w, ln2b = ln2w_ref[0, 0], ln2b_ref[0, 0]
    wqkv, bqkv = wqkv_ref[0], bqkv_ref[0, 0]       # (C, 3C), (3C,)  Q pre-scaled
    wpr, bpr = wpr_ref[0], bpr_ref[0, 0]           # (C, C),  (C,)
    wfc, bfc = wfc_ref[0], bfc_ref[0, 0]           # (C, 4C), (4C,)
    wmp, bmp = wmp_ref[0], bmp_ref[0, 0]           # (4C, C), (C,)

    # precomputed block-diagonal causal additive bias (B*T, B*T):
    # 0 within the same batch element on/below the diagonal, -1e30 elsewhere.
    attn_bias = bias_ref[...]

    x2d = xbuf[...]                                    # (B*T, C)

    # ---- causal self-attention (batch folded into matmul rows + bias) ------
    h = _layernorm(x2d, ln1w, ln1b)
    qkv = _mm(h, wqkv) + bqkv                          # (B*T, 3C)

    head_outs = []
    for hh in range(n_head):                           # small static unroll
        lo = hh * hd
        q = qkv[:, lo:lo + hd]                         # (B*T, hd) (Q pre-scaled)
        k = qkv[:, C + lo:C + lo + hd]
        v = qkv[:, 2 * C + lo:2 * C + lo + hd]
        s = _mm_nt(q, k) + attn_bias                   # (B*T, B*T)
        s = s - jnp.max(s, axis=-1, keepdims=True)
        e = jnp.exp(s)
        inv = pl.reciprocal(jnp.sum(e, axis=-1, keepdims=True), approx=True)
        head_outs.append(_mm(e * inv, v))              # (B*T, hd)
    y = jnp.concatenate(head_outs, axis=-1)            # (B*T, C), heads on lanes

    x2d = x2d + _mm(y, wpr) + bpr                      # single (B*T,C)@(C,C)

    # ---- MLP sub-block ----
    h = _layernorm(x2d, ln2w, ln2b)
    h = _gelu_exact(_mm(h, wfc) + bfc)                 # GELU once on (B*T,4C)
    h = _mm(h, wmp) + bmp
    x2d = x2d + h

    xbuf[...] = x2d

    @pl.when(layer == n_layers - 1)
    def _final():
        # gather last token of every batch element -> (B, C)
        last = jnp.concatenate(
            [x2d[b * T + T - 1:b * T + T, :] for b in range(B)], axis=0)
        last = _layernorm(last, lnfw_ref[0], lnfb_ref[0])
        logits_ref[...] = _mm(last, wlm_ref[...])      # one lane-dense (B, V) store


# --------------------------- host-side wrapper --------------------------------


def gpt_forward(idx, params, cfg: GPTConfig):
    B, T = idx.shape
    C, V, L, nh = cfg.n_embd, cfg.vocab_size, cfg.n_layer, cfg.n_head
    hd = C // nh
    scale = 1.0 / math.sqrt(hd)
    assert T <= cfg.block_size

    # embedding gather (glue, plain JAX) + dropout(p=0) == identity
    x = (params["wte"][idx] + params["wpe"][:T][None]).astype(jnp.float32)
    x = x.reshape(B * T, C)                            # fold batch into rows

    # block-diagonal causal additive bias, built once host-side
    rows = np.arange(B * T)
    same_b = (rows[:, None] // T) == (rows[None, :] // T)
    causal = (rows[None, :] % T) <= (rows[:, None] % T)
    attn_bias = jnp.asarray(
        np.where(same_b & causal, 0.0, -1e30).astype(np.float32))

    lyr = params["layers"]
    stk = lambda name: jnp.stack([l[name] for l in lyr])

    def qkv_weight(l):                                 # fold 1/sqrt(hd) into Q cols
        w = l["attn_w"].T                              # (C, 3C)
        return jnp.concatenate([w[:, :C] * scale, w[:, C:]], axis=1)

    def qkv_bias(l):
        b = l["attn_b"]
        return jnp.concatenate([b[:C] * scale, b[C:]], axis=0)

    ln1w = stk("ln1_w")[:, None, :]                    # (L, 1, C)
    ln1b = stk("ln1_b")[:, None, :]
    ln2w = stk("ln2_w")[:, None, :]
    ln2b = stk("ln2_b")[:, None, :]
    wqkv_t = jnp.stack([qkv_weight(l) for l in lyr])          # (L, C, 3C)
    bqkv = jnp.stack([qkv_bias(l) for l in lyr])[:, None, :]  # (L, 1, 3C)
    wpr_t = jnp.stack([l["attn_proj_w"].T for l in lyr])      # (L, C, C)
    bpr = stk("attn_proj_b")[:, None, :]                      # (L, 1, C)
    wfc_t = jnp.stack([l["fc_w"].T for l in lyr])             # (L, C, 4C)
    bfc = stk("fc_b")[:, None, :]                             # (L, 1, 4C)
    wmp_t = jnp.stack([l["mlp_proj_w"].T for l in lyr])       # (L, 4C, C)
    bmp = stk("mlp_proj_b")[:, None, :]                       # (L, 1, C)
    lnf_w = params["lnf_w"][None, :]                          # (1, C)
    lnf_b = params["lnf_b"][None, :]
    wlm_t = params["wte"].T                                   # (C, V) tied

    per_layer = lambda shape: pl.BlockSpec(shape, lambda l: (l, 0, 0))
    shared = lambda shape: pl.BlockSpec(shape, lambda l: tuple(0 for _ in shape))

    logits2d = pl.pallas_call(
        functools.partial(gpt_kernel, n_head=nh, batch=B, seq=T),
        out_shape=jax.ShapeDtypeStruct((B, V), jnp.float32),
        grid_spec=pltpu.PrefetchScalarGridSpec(
            num_scalar_prefetch=0,
            grid=(L,),
            in_specs=[
                shared((B * T, C)),                # embedded input (rows)
                shared((B * T, B * T)),            # block-diag causal bias
                per_layer((1, 1, C)),              # ln1 weight
                per_layer((1, 1, C)),              # ln1 bias
                per_layer((1, C, 3 * C)),          # c_attn weight^T (Q scaled)
                per_layer((1, 1, 3 * C)),          # c_attn bias (Q scaled)
                per_layer((1, C, C)),              # attn c_proj weight^T
                per_layer((1, 1, C)),              # attn c_proj bias
                per_layer((1, 1, C)),              # ln2 weight
                per_layer((1, 1, C)),              # ln2 bias
                per_layer((1, C, 4 * C)),          # mlp c_fc weight^T
                per_layer((1, 1, 4 * C)),          # mlp c_fc bias
                per_layer((1, 4 * C, C)),          # mlp c_proj weight^T
                per_layer((1, 1, C)),              # mlp c_proj bias
                shared((1, C)),                    # ln_f weight
                shared((1, C)),                    # ln_f bias
                shared((C, V)),                    # lm_head weight^T (tied wte)
            ],
            out_specs=pl.BlockSpec((B, V), lambda l: (0, 0)),
            scratch_shapes=[
                pltpu.VMEM((B * T, C), jnp.float32),   # running residual stream
            ],
        ),
        compiler_params=pltpu.CompilerParams(
            dimension_semantics=("arbitrary",)),   # layers are sequential
    )(x, attn_bias, ln1w, ln1b, wqkv_t, bqkv, wpr_t, bpr,
      ln2w, ln2b, wfc_t, bfc, wmp_t, bmp, lnf_w, lnf_b, wlm_t)

    # PyTorch returns lm_head(x[:, [-1], :]) -> (B, 1, vocab)
    return logits2d.reshape(B, 1, V)
    # TODO(synk): training path (targets -> cross_entropy loss) and generate()
    # sampling loop are host-side control flow, not implemented here.


# -------------------- deterministic parameter init ---------------------------


def init_params(cfg: GPTConfig, key):
    C, V, L, Tmax = cfg.n_embd, cfg.vocab_size, cfg.n_layer, cfg.block_size
    std = 0.02
    std_proj = 0.02 / math.sqrt(2 * L)   # c_proj.weight special init
    keys = jax.random.split(key, 2 + 4 * L)
    f32 = jnp.float32
    wte = std * jax.random.normal(keys[0], (V, C), f32)
    wpe = std * jax.random.normal(keys[1], (Tmax, C), f32)
    layers = []
    for l in range(L):
        k = keys[2 + 4 * l: 2 + 4 * (l + 1)]
        layers.append(dict(
            ln1_w=jnp.ones((C,), f32), ln1_b=jnp.zeros((C,), f32),
            attn_w=std * jax.random.normal(k[0], (3 * C, C), f32),
            attn_b=jnp.zeros((3 * C,), f32),
            attn_proj_w=std_proj * jax.random.normal(k[1], (C, C), f32),
            attn_proj_b=jnp.zeros((C,), f32),
            ln2_w=jnp.ones((C,), f32), ln2_b=jnp.zeros((C,), f32),
            fc_w=std * jax.random.normal(k[2], (4 * C, C), f32),
            fc_b=jnp.zeros((4 * C,), f32),
            mlp_proj_w=std_proj * jax.random.normal(k[3], (C, 4 * C), f32),
            mlp_proj_b=jnp.zeros((C,), f32),
        ))
    return dict(wte=wte, wpe=wpe, layers=layers,
                lnf_w=jnp.ones((C,), f32), lnf_b=jnp.zeros((C,), f32))


# --------------------------- pure-JAX reference -------------------------------


def ref_forward(idx, p, cfg: GPTConfig):
    B, T = idx.shape
    C, nh = cfg.n_embd, cfg.n_head
    hd = C // nh

    def ln(x, w, b):
        mu = x.mean(-1, keepdims=True)
        var = ((x - mu) ** 2).mean(-1, keepdims=True)
        return (x - mu) / jnp.sqrt(var + 1e-5) * w + b

    x = p["wte"][idx] + p["wpe"][:T][None]
    mask = jnp.tril(jnp.ones((T, T), bool))
    for lyr in p["layers"]:
        h = ln(x, lyr["ln1_w"], lyr["ln1_b"])
        qkv = h @ lyr["attn_w"].T + lyr["attn_b"]
        q, k, v = jnp.split(qkv, 3, axis=-1)
        q = q.reshape(B, T, nh, hd).transpose(0, 2, 1, 3)
        k = k.reshape(B, T, nh, hd).transpose(0, 2, 1, 3)
        v = v.reshape(B, T, nh, hd).transpose(0, 2, 1, 3)
        s = (q @ jnp.swapaxes(k, -1, -2)) * (hd ** -0.5)
        s = jnp.where(mask, s, -jnp.inf)
        w_ = jax.nn.softmax(s, axis=-1)
        y = (w_ @ v).transpose(0, 2, 1, 3).reshape(B, T, C)
        x = x + y @ lyr["attn_proj_w"].T + lyr["attn_proj_b"]
        h = ln(x, lyr["ln2_w"], lyr["ln2_b"])
        h = jax.nn.gelu(h @ lyr["fc_w"].T + lyr["fc_b"], approximate=False)
        x = x + h @ lyr["mlp_proj_w"].T + lyr["mlp_proj_b"]
    x = ln(x, p["lnf_w"], p["lnf_b"])
    return x[:, -1:, :] @ p["wte"].T    # (B, 1, V)


# ------------------------------- main ----------------------------------------


if __name__ == "__main__":
    cfg = GPTConfig(block_size=8, vocab_size=128, n_layer=2, n_head=4,
                    n_embd=32, dropout=0.0, bias=True)
    key = jax.random.PRNGKey(0)
    pkey, ikey = jax.random.split(key)
    params = init_params(cfg, pkey)
    idx = jax.random.randint(ikey, (2, cfg.block_size), 0, cfg.vocab_size,
                             dtype=jnp.int32)

    logits = gpt_forward(idx, params, cfg)
    logits = jax.block_until_ready(logits)

    ref = ref_forward(idx, params, cfg)
    np.testing.assert_allclose(np.asarray(logits), np.asarray(ref),
                               rtol=1e-2, atol=1e-4)
    print("KERNEL_OK")
</pallas_src>

<mosaic_0001>
module attributes {stable_mosaic.version = 11 : i64} {
  func.func @gpt_kernel(%arg0: i32, %arg1: memref<16x32xf32, #tpu.memory_space<vmem>>, %arg2: memref<16x16xf32, #tpu.memory_space<vmem>>, %arg3: memref<1x1x32xf32, #tpu.memory_space<vmem>>, %arg4: memref<1x1x32xf32, #tpu.memory_space<vmem>>, %arg5: memref<1x32x96xf32, #tpu.memory_space<vmem>>, %arg6: memref<1x1x96xf32, #tpu.memory_space<vmem>>, %arg7: memref<1x32x32xf32, #tpu.memory_space<vmem>>, %arg8: memref<1x1x32xf32, #tpu.memory_space<vmem>>, %arg9: memref<1x1x32xf32, #tpu.memory_space<vmem>>, %arg10: memref<1x1x32xf32, #tpu.memory_space<vmem>>, %arg11: memref<1x32x128xf32, #tpu.memory_space<vmem>>, %arg12: memref<1x1x128xf32, #tpu.memory_space<vmem>>, %arg13: memref<1x128x32xf32, #tpu.memory_space<vmem>>, %arg14: memref<1x1x32xf32, #tpu.memory_space<vmem>>, %arg15: memref<1x32xf32, #tpu.memory_space<vmem>>, %arg16: memref<1x32xf32, #tpu.memory_space<vmem>>, %arg17: memref<32x128xf32, #tpu.memory_space<vmem>>, %arg18: memref<2x128xf32, #tpu.memory_space<vmem>>, %arg19: memref<16x32xf32, #tpu.memory_space<vmem>>) attributes {dimension_semantics = [#tpu.dimension_semantics<arbitrary>], iteration_bounds = array<i64: 2>, scalar_prefetch = 0 : i64, scratch_operands = 1 : i64, tpu.core_type = #tpu.core_type<tc>, window_params = [{pipeline_mode = #tpu.pipeline_mode<synchronous>, transform_indices = @transform_0, window_bounds = array<i64: 16, 32>}, {pipeline_mode = #tpu.pipeline_mode<synchronous>, transform_indices = @transform_1, window_bounds = array<i64: 16, 16>}, {transform_indices = @transform_2, window_bounds = array<i64: 1, 1, 32>}, {transform_indices = @transform_3, window_bounds = array<i64: 1, 1, 32>}, {transform_indices = @transform_4, window_bounds = array<i64: 1, 32, 96>}, {transform_indices = @transform_5, window_bounds = array<i64: 1, 1, 96>}, {transform_indices = @transform_6, window_bounds = array<i64: 1, 32, 32>}, {transform_indices = @transform_7, window_bounds = array<i64: 1, 1, 32>}, {transform_indices = @transform_8, window_bounds = array<i64: 1, 1, 32>}, {transform_indices = @transform_9, window_bounds = array<i64: 1, 1, 32>}, {transform_indices = @transform_10, window_bounds = array<i64: 1, 32, 128>}, {transform_indices = @transform_11, window_bounds = array<i64: 1, 1, 128>}, {transform_indices = @transform_12, window_bounds = array<i64: 1, 128, 32>}, {transform_indices = @transform_13, window_bounds = array<i64: 1, 1, 32>}, {pipeline_mode = #tpu.pipeline_mode<synchronous>, transform_indices = @transform_14, window_bounds = array<i64: 1, 32>}, {pipeline_mode = #tpu.pipeline_mode<synchronous>, transform_indices = @transform_15, window_bounds = array<i64: 1, 32>}, {pipeline_mode = #tpu.pipeline_mode<synchronous>, transform_indices = @transform_16, window_bounds = array<i64: 32, 128>}, {pipeline_mode = #tpu.pipeline_mode<synchronous>, transform_indices = @transform_17, window_bounds = array<i64: 2, 128>}]} {
    %c0_i32 = arith.constant 0 : i32
    %0 = arith.cmpi eq, %arg0, %c0_i32 : i32
    %1 = arith.extui %0 : i1 to i32
    %c0_i32_0 = arith.constant 0 : i32
    %2 = arith.cmpi ne, %1, %c0_i32_0 : i32
    scf.if %2 {
      %c0_88 = arith.constant 0 : index
      %c0_89 = arith.constant 0 : index
      %201 = vector.load %arg1[%c0_88, %c0_89] : memref<16x32xf32, #tpu.memory_space<vmem>>, vector<16x32xf32>
      %c0_90 = arith.constant 0 : index
      %c0_91 = arith.constant 0 : index
      %202 = vector.load %arg19[%c0_90, %c0_91] : memref<16x32xf32, #tpu.memory_space<vmem>>, vector<16x32xf32>
      tpu.vector_store %arg19[%c0_90, %c0_91], %201 {strides = array<i32>} : memref<16x32xf32, #tpu.memory_space<vmem>>, vector<16x32xf32>,
    } else {
    }
    %c0 = arith.constant 0 : index
    %c0_1 = arith.constant 0 : index
    %c0_2 = arith.constant 0 : index
    %3 = vector.load %arg3[%c0, %c0_1, %c0_2] : memref<1x1x32xf32, #tpu.memory_space<vmem>>, vector<1x1x32xf32>
    %4 = vector.shape_cast %3 : vector<1x1x32xf32> to vector<32xf32>
    %c0_3 = arith.constant 0 : index
    %c0_4 = arith.constant 0 : index
    %c0_5 = arith.constant 0 : index
    %5 = vector.load %arg4[%c0_3, %c0_4, %c0_5] : memref<1x1x32xf32, #tpu.memory_space<vmem>>, vector<1x1x32xf32>
    %6 = vector.shape_cast %5 : vector<1x1x32xf32> to vector<32xf32>
    %c0_6 = arith.constant 0 : index
    %c0_7 = arith.constant 0 : index
    %c0_8 = arith.constant 0 : index
    %7 = vector.load %arg9[%c0_6, %c0_7, %c0_8] : memref<1x1x32xf32, #tpu.memory_space<vmem>>, vector<1x1x32xf32>
    %8 = vector.shape_cast %7 : vector<1x1x32xf32> to vector<32xf32>
    %c0_9 = arith.constant 0 : index
    %c0_10 = arith.constant 0 : index
    %c0_11 = arith.constant 0 : index
    %9 = vector.load %arg10[%c0_9, %c0_10, %c0_11] : memref<1x1x32xf32, #tpu.memory_space<vmem>>, vector<1x1x32xf32>
    %10 = vector.shape_cast %9 : vector<1x1x32xf32> to vector<32xf32>
    %c0_12 = arith.constant 0 : index
    %c0_13 = arith.constant 0 : index
    %c0_14 = arith.constant 0 : index
    %11 = vector.load %arg5[%c0_12, %c0_13, %c0_14] : memref<1x32x96xf32, #tpu.memory_space<vmem>>, vector<1x32x96xf32>
    %12 = vector.shape_cast %11 : vector<1x32x96xf32> to vector<32x96xf32>
    %c0_15 = arith.constant 0 : index
    %c0_16 = arith.constant 0 : index
    %c0_17 = arith.constant 0 : index
    %13 = vector.load %arg6[%c0_15, %c0_16, %c0_17] : memref<1x1x96xf32, #tpu.memory_space<vmem>>, vector<1x1x96xf32>
    %14 = vector.shape_cast %13 : vector<1x1x96xf32> to vector<96xf32>
    %c0_18 = arith.constant 0 : index
    %c0_19 = arith.constant 0 : index
    %c0_20 = arith.constant 0 : index
    %15 = vector.load %arg7[%c0_18, %c0_19, %c0_20] : memref<1x32x32xf32, #tpu.memory_space<vmem>>, vector<1x32x32xf32>
    %16 = vector.shape_cast %15 : vector<1x32x32xf32> to vector<32x32xf32>
    %c0_21 = arith.constant 0 : index
    %c0_22 = arith.constant 0 : index
    %c0_23 = arith.constant 0 : index
    %17 = vector.load %arg8[%c0_21, %c0_22, %c0_23] : memref<1x1x32xf32, #tpu.memory_space<vmem>>, vector<1x1x32xf32>
    %18 = vector.shape_cast %17 : vector<1x1x32xf32> to vector<32xf32>
    %c0_24 = arith.constant 0 : index
    %c0_25 = arith.constant 0 : index
    %c0_26 = arith.constant 0 : index
    %19 = vector.load %arg11[%c0_24, %c0_25, %c0_26] : memref<1x32x128xf32, #tpu.memory_space<vmem>>, vector<1x32x128xf32>
    %20 = vector.shape_cast %19 : vector<1x32x128xf32> to vector<32x128xf32>
    %c0_27 = arith.constant 0 : index
    %c0_28 = arith.constant 0 : index
    %c0_29 = arith.constant 0 : index
    %21 = vector.load %arg12[%c0_27, %c0_28, %c0_29] : memref<1x1x128xf32, #tpu.memory_space<vmem>>, vector<1x1x128xf32>
    %22 = vector.shape_cast %21 : vector<1x1x128xf32> to vector<128xf32>
    %c0_30 = arith.constant 0 : index
    %c0_31 = arith.constant 0 : index
    %c0_32 = arith.constant 0 : index
    %23 = vector.load %arg13[%c0_30, %c0_31, %c0_32] : memref<1x128x32xf32, #tpu.memory_space<vmem>>, vector<1x128x32xf32>
    %24 = vector.shape_cast %23 : vector<1x128x32xf32> to vector<128x32xf32>
    %c0_33 = arith.constant 0 : index
    %c0_34 = arith.constant 0 : index
    %c0_35 = arith.constant 0 : index
    %25 = vector.load %arg14[%c0_33, %c0_34, %c0_35] : memref<1x1x32xf32, #tpu.memory_space<vmem>>, vector<1x1x32xf32>
    %26 = vector.shape_cast %25 : vector<1x1x32xf32> to vector<32xf32>
    %c0_36 = arith.constant 0 : index
    %c0_37 = arith.constant 0 : index
    %27 = vector.load %arg2[%c0_36, %c0_37] : memref<16x16xf32, #tpu.memory_space<vmem>>, vector<16x16xf32>
    %c0_38 = arith.constant 0 : index
    %c0_39 = arith.constant 0 : index
    %28 = vector.load %arg19[%c0_38, %c0_39] : memref<16x32xf32, #tpu.memory_space<vmem>>, vector<16x32xf32>
    %cst = arith.constant dense<0.000000e+00> : vector<16xf32>
    %29 = vector.multi_reduction <add>, %28, %cst [1] : vector<16x32xf32> to vector<16xf32>
    %30 = vector.shape_cast %29 : vector<16xf32> to vector<16x1xf32>
    %cst_40 = arith.constant 3.200000e+01 : f32
    %31 = vector.broadcast %cst_40 : f32 to vector<16x1xf32>
    %32 = arith.divf %30, %31 : vector<16x1xf32>
    %33 = vector.broadcast %32 : vector<16x1xf32> to vector<16x32xf32>
    %34 = arith.subf %28, %33 : vector<16x32xf32>
    %35 = arith.mulf %34, %34 : vector<16x32xf32>
    %cst_41 = arith.constant dense<0.000000e+00> : vector<16xf32>
    %36 = vector.multi_reduction <add>, %35, %cst_41 [1] : vector<16x32xf32> to vector<16xf32>
    %37 = vector.shape_cast %36 : vector<16xf32> to vector<16x1xf32>
    %cst_42 = arith.constant 3.200000e+01 : f32
    %38 = vector.broadcast %cst_42 : f32 to vector<16x1xf32>
    %39 = arith.divf %37, %38 : vector<16x1xf32>
    %cst_43 = arith.constant 9.99999974E-6 : f32
    %40 = vector.broadcast %cst_43 : f32 to vector<16x1xf32>
    %41 = arith.addf %39, %40 : vector<16x1xf32>
    %42 = math.rsqrt %41 : vector<16x1xf32>
    %43 = vector.broadcast %42 : vector<16x1xf32> to vector<16x32xf32>
    %44 = arith.mulf %34, %43 : vector<16x32xf32>
    %45 = vector.shape_cast %4 : vector<32xf32> to vector<1x32xf32>
    %46 = vector.broadcast %45 : vector<1x32xf32> to vector<16x32xf32>
    %47 = arith.mulf %44, %46 : vector<16x32xf32>
    %48 = vector.shape_cast %6 : vector<32xf32> to vector<1x32xf32>
    %49 = vector.broadcast %48 : vector<1x32xf32> to vector<16x32xf32>
    %50 = arith.addf %47, %49 : vector<16x32xf32>
    %cst_44 = arith.constant dense<0.000000e+00> : vector<16x96xf32>
    %51 = tpu.matmul %50, %12, %cst_44 {dimension_numbers = #tpu.dot_dimension_numbers<[1], [0], [0], [1], [0, 0, 1, 1], [], []>} : vector<16x32xf32>, vector<32x96xf32>, vector<16x96xf32> -> vector<16x96xf32>
    %52 = vector.shape_cast %14 : vector<96xf32> to vector<1x96xf32>
    %53 = vector.broadcast %52 : vector<1x96xf32> to vector<16x96xf32>
    %54 = arith.addf %51, %53 : vector<16x96xf32>
    %55 = vector.extract_strided_slice %54 {offsets = [0, 0], sizes = [16, 8], strides = [1, 1]} : vector<16x96xf32> to vector<16x8xf32>
    %56 = vector.extract_strided_slice %54 {offsets = [0, 32], sizes = [16, 8], strides = [1, 1]} : vector<16x96xf32> to vector<16x8xf32>
    %57 = vector.extract_strided_slice %54 {offsets = [0, 64], sizes = [16, 8], strides = [1, 1]} : vector<16x96xf32> to vector<16x8xf32>
    %cst_45 = arith.constant dense<0.000000e+00> : vector<16x16xf32>
    %58 = tpu.matmul %55, %56, %cst_45 {dimension_numbers = #tpu.dot_dimension_numbers<[1], [1], [0], [0], [0, 0, 1, 0], [], []>} : vector<16x8xf32>, vector<16x8xf32>, vector<16x16xf32> -> vector<16x16xf32>
    %59 = arith.addf %58, %27 : vector<16x16xf32>
    %cst_46 = arith.constant dense<0xFF800000> : vector<16xf32>
    %60 = vector.multi_reduction <maximumf>, %59, %cst_46 [1] : vector<16x16xf32> to vector<16xf32>
    %61 = vector.shape_cast %60 : vector<16xf32> to vector<16x1xf32>
    %62 = vector.broadcast %61 : vector<16x1xf32> to vector<16x16xf32>
    %63 = arith.subf %59, %62 : vector<16x16xf32>
    %64 = math.exp %63 : vector<16x16xf32>
    %cst_47 = arith.constant dense<0.000000e+00> : vector<16xf32>
    %65 = vector.multi_reduction <add>, %64, %cst_47 [1] : vector<16x16xf32> to vector<16xf32>
    %66 = vector.shape_cast %65 : vector<16xf32> to vector<16x1xf32>
    %67 = tpu.reciprocal %66 {approx = true} : vector<16x1xf32> -> vector<16x1xf32>
    %68 = vector.broadcast %67 : vector<16x1xf32> to vector<16x16xf32>
    %69 = arith.mulf %64, %68 : vector<16x16xf32>
    %cst_48 = arith.constant dense<0.000000e+00> : vector<16x8xf32>
    %70 = tpu.matmul %69, %57, %cst_48 {dimension_numbers = #tpu.dot_dimension_numbers<[1], [0], [0], [1], [0, 0, 1, 1], [], []>} : vector<16x16xf32>, vector<16x8xf32>, vector<16x8xf32> -> vector<16x8xf32>
    %71 = vector.extract_strided_slice %54 {offsets = [0, 8], sizes = [16, 8], strides = [1, 1]} : vector<16x96xf32> to vector<16x8xf32>
    %72 = vector.extract_strided_slice %54 {offsets = [0, 40], sizes = [16, 8], strides = [1, 1]} : vector<16x96xf32> to vector<16x8xf32>
    %73 = vector.extract_strided_slice %54 {offsets = [0, 72], sizes = [16, 8], strides = [1, 1]} : vector<16x96xf32> to vector<16x8xf32>
    %cst_49 = arith.constant dense<0.000000e+00> : vector<16x16xf32>
    %74 = tpu.matmul %71, %72, %cst_49 {dimension_numbers = #tpu.dot_dimension_numbers<[1], [1], [0], [0], [0, 0, 1, 0], [], []>} : vector<16x8xf32>, vector<16x8xf32>, vector<16x16xf32> -> vector<16x16xf32>
    %75 = arith.addf %74, %27 : vector<16x16xf32>
    %cst_50 = arith.constant dense<0xFF800000> : vector<16xf32>
    %76 = vector.multi_reduction <maximumf>, %75, %cst_50 [1] : vector<16x16xf32> to vector<16xf32>
    %77 = vector.shape_cast %76 : vector<16xf32> to vector<16x1xf32>
    %78 = vector.broadcast %77 : vector<16x1xf32> to vector<16x16xf32>
    %79 = arith.subf %75, %78 : vector<16x16xf32>
    %80 = math.exp %79 : vector<16x16xf32>
    %cst_51 = arith.constant dense<0.000000e+00> : vector<16xf32>
    %81 = vector.multi_reduction <add>, %80, %cst_51 [1] : vector<16x16xf32> to vector<16xf32>
    %82 = vector.shape_cast %81 : vector<16xf32> to vector<16x1xf32>
    %83 = tpu.reciprocal %82 {approx = true} : vector<16x1xf32> -> vector<16x1xf32>
    %84 = vector.broadcast %83 : vector<16x1xf32> to vector<16x16xf32>
    %85 = arith.mulf %80, %84 : vector<16x16xf32>
    %cst_52 = arith.constant dense<0.000000e+00> : vector<16x8xf32>
    %86 = tpu.matmul %85, %73, %cst_52 {dimension_numbers = #tpu.dot_dimension_numbers<[1], [0], [0], [1], [0, 0, 1, 1], [], []>} : vector<16x16xf32>, vector<16x8xf32>, vector<16x8xf32> -> vector<16x8xf32>
    %87 = vector.extract_strided_slice %54 {offsets = [0, 16], sizes = [16, 8], strides = [1, 1]} : vector<16x96xf32> to vector<16x8xf32>
    %88 = vector.extract_strided_slice %54 {offsets = [0, 48], sizes = [16, 8], strides = [1, 1]} : vector<16x96xf32> to vector<16x8xf32>
    %89 = vector.extract_strided_slice %54 {offsets = [0, 80], sizes = [16, 8], strides = [1, 1]} : vector<16x96xf32> to vector<16x8xf32>
    %cst_53 = arith.constant dense<0.000000e+00> : vector<16x16xf32>
    %90 = tpu.matmul %87, %88, %cst_53 {dimension_numbers = #tpu.dot_dimension_numbers<[1], [1], [0], [0], [0, 0, 1, 0], [], []>} : vector<16x8xf32>, vector<16x8xf32>, vector<16x16xf32> -> vector<16x16xf32>
    %91 = arith.addf %90, %27 : vector<16x16xf32>
    %cst_54 = arith.constant dense<0xFF800000> : vector<16xf32>
    %92 = vector.multi_reduction <maximumf>, %91, %cst_54 [1] : vector<16x16xf32> to vector<16xf32>
    %93 = vector.shape_cast %92 : vector<16xf32> to vector<16x1xf32>
    %94 = vector.broadcast %93 : vector<16x1xf32> to vector<16x16xf32>
    %95 = arith.subf %91, %94 : vector<16x16xf32>
    %96 = math.exp %95 : vector<16x16xf32>
    %cst_55 = arith.constant dense<0.000000e+00> : vector<16xf32>
    %97 = vector.multi_reduction <add>, %96, %cst_55 [1] : vector<16x16xf32> to vector<16xf32>
    %98 = vector.shape_cast %97 : vector<16xf32> to vector<16x1xf32>
    %99 = tpu.reciprocal %98 {approx = true} : vector<16x1xf32> -> vector<16x1xf32>
    %100 = vector.broadcast %99 : vector<16x1xf32> to vector<16x16xf32>
    %101 = arith.mulf %96, %100 : vector<16x16xf32>
    %cst_56 = arith.constant dense<0.000000e+00> : vector<16x8xf32>
    %102 = tpu.matmul %101, %89, %cst_56 {dimension_numbers = #tpu.dot_dimension_numbers<[1], [0], [0], [1], [0, 0, 1, 1], [], []>} : vector<16x16xf32>, vector<16x8xf32>, vector<16x8xf32> -> vector<16x8xf32>
    %103 = vector.extract_strided_slice %54 {offsets = [0, 24], sizes = [16, 8], strides = [1, 1]} : vector<16x96xf32> to vector<16x8xf32>
    %104 = vector.extract_strided_slice %54 {offsets = [0, 56], sizes = [16, 8], strides = [1, 1]} : vector<16x96xf32> to vector<16x8xf32>
    %105 = vector.extract_strided_slice %54 {offsets = [0, 88], sizes = [16, 8], strides = [1, 1]} : vector<16x96xf32> to vector<16x8xf32>
    %cst_57 = arith.constant dense<0.000000e+00> : vector<16x16xf32>
    %106 = tpu.matmul %103, %104, %cst_57 {dimension_numbers = #tpu.dot_dimension_numbers<[1], [1], [0], [0], [0, 0, 1, 0], [], []>} : vector<16x8xf32>, vector<16x8xf32>, vector<16x16xf32> -> vector<16x16xf32>
    %107 = arith.addf %106, %27 : vector<16x16xf32>
    %cst_58 = arith.constant dense<0xFF800000> : vector<16xf32>
    %108 = vector.multi_reduction <maximumf>, %107, %cst_58 [1] : vector<16x16xf32> to vector<16xf32>
    %109 = vector.shape_cast %108 : vector<16xf32> to vector<16x1xf32>
    %110 = vector.broadcast %109 : vector<16x1xf32> to vector<16x16xf32>
    %111 = arith.subf %107, %110 : vector<16x16xf32>
    %112 = math.exp %111 : vector<16x16xf32>
    %cst_59 = arith.constant dense<0.000000e+00> : vector<16xf32>
    %113 = vector.multi_reduction <add>, %112, %cst_59 [1] : vector<16x16xf32> to vector<16xf32>
    %114 = vector.shape_cast %113 : vector<16xf32> to vector<16x1xf32>
    %115 = tpu.reciprocal %114 {approx = true} : vector<16x1xf32> -> vector<16x1xf32>
    %116 = vector.broadcast %115 : vector<16x1xf32> to vector<16x16xf32>
    %117 = arith.mulf %112, %116 : vector<16x16xf32>
    %cst_60 = arith.constant dense<0.000000e+00> : vector<16x8xf32>
    %118 = tpu.matmul %117, %105, %cst_60 {dimension_numbers = #tpu.dot_dimension_numbers<[1], [0], [0], [1], [0, 0, 1, 1], [], []>} : vector<16x16xf32>, vector<16x8xf32>, vector<16x8xf32> -> vector<16x8xf32>
    %119 = tpu.concatenate %70, %86, %102, %118 in 1 : vector<16x8xf32>, vector<16x8xf32>, vector<16x8xf32>, vector<16x8xf32> -> vector<16x32xf32>
    %cst_61 = arith.constant dense<0.000000e+00> : vector<16x32xf32>
    %120 = tpu.matmul %119, %16, %cst_61 {dimension_numbers = #tpu.dot_dimension_numbers<[1], [0], [0], [1], [0, 0, 1, 1], [], []>} : vector<16x32xf32>, vector<32x32xf32>, vector<16x32xf32> -> vector<16x32xf32>
    %121 = arith.addf %28, %120 : vector<16x32xf32>
    %122 = vector.shape_cast %18 : vector<32xf32> to vector<1x32xf32>
    %123 = vector.broadcast %122 : vector<1x32xf32> to vector<16x32xf32>
    %124 = arith.addf %121, %123 : vector<16x32xf32>
    %cst_62 = arith.constant dense<0.000000e+00> : vector<16xf32>
    %125 = vector.multi_reduction <add>, %124, %cst_62 [1] : vector<16x32xf32> to vector<16xf32>
    %126 = vector.shape_cast %125 : vector<16xf32> to vector<16x1xf32>
    %cst_63 = arith.constant 3.200000e+01 : f32
    %127 = vector.broadcast %cst_63 : f32 to vector<16x1xf32>
    %128 = arith.divf %126, %127 : vector<16x1xf32>
    %129 = vector.broadcast %128 : vector<16x1xf32> to vector<16x32xf32>
    %130 = arith.subf %124, %129 : vector<16x32xf32>
    %131 = arith.mulf %130, %130 : vector<16x32xf32>
    %cst_64 = arith.constant dense<0.000000e+00> : vector<16xf32>
    %132 = vector.multi_reduction <add>, %131, %cst_64 [1] : vector<16x32xf32> to vector<16xf32>
    %133 = vector.shape_cast %132 : vector<16xf32> to vector<16x1xf32>
    %cst_65 = arith.constant 3.200000e+01 : f32
    %134 = vector.broadcast %cst_65 : f32 to vector<16x1xf32>
    %135 = arith.divf %133, %134 : vector<16x1xf32>
    %cst_66 = arith.constant 9.99999974E-6 : f32
    %136 = vector.broadcast %cst_66 : f32 to vector<16x1xf32>
    %137 = arith.addf %135, %136 : vector<16x1xf32>
    %138 = math.rsqrt %137 : vector<16x1xf32>
    %139 = vector.broadcast %138 : vector<16x1xf32> to vector<16x32xf32>
    %140 = arith.mulf %130, %139 : vector<16x32xf32>
    %141 = vector.shape_cast %8 : vector<32xf32> to vector<1x32xf32>
    %142 = vector.broadcast %141 : vector<1x32xf32> to vector<16x32xf32>
    %143 = arith.mulf %140, %142 : vector<16x32xf32>
    %144 = vector.shape_cast %10 : vector<32xf32> to vector<1x32xf32>
    %145 = vector.broadcast %144 : vector<1x32xf32> to vector<16x32xf32>
    %146 = arith.addf %143, %145 : vector<16x32xf32>
    %cst_67 = arith.constant dense<0.000000e+00> : vector<16x128xf32>
    %147 = tpu.matmul %146, %20, %cst_67 {dimension_numbers = #tpu.dot_dimension_numbers<[1], [0], [0], [1], [0, 0, 1, 1], [], []>} : vector<16x32xf32>, vector<32x128xf32>, vector<16x128xf32> -> vector<16x128xf32>
    %148 = vector.shape_cast %22 : vector<128xf32> to vector<1x128xf32>
    %149 = vector.broadcast %148 : vector<1x128xf32> to vector<16x128xf32>
    %150 = arith.addf %147, %149 : vector<16x128xf32>
    %cst_68 = arith.constant 5.000000e-01 : f32
    %151 = vector.broadcast %cst_68 : f32 to vector<16x128xf32>
    %152 = arith.mulf %151, %150 : vector<16x128xf32>
    %cst_69 = arith.constant 0.707106769 : f32
    %153 = vector.broadcast %cst_69 : f32 to vector<16x128xf32>
    %154 = arith.mulf %150, %153 : vector<16x128xf32>
    %cst_70 = arith.constant 0.000000e+00 : f32
    %155 = vector.broadcast %cst_70 : f32 to vector<16x128xf32>
    %156 = arith.cmpf olt, %154, %155 : vector<16x128xf32>
    %cst_71 = arith.constant -1.000000e+00 : f32
    %cst_72 = arith.constant 1.000000e+00 : f32
    %157 = vector.broadcast %cst_71 : f32 to vector<16x128xf32>
    %158 = vector.broadcast %cst_72 : f32 to vector<16x128xf32>
    %159 = arith.select %156, %157, %158 : vector<16x128xi1>, vector<16x128xf32>
    %160 = math.absf %154 : vector<16x128xf32>
    %cst_73 = arith.constant 0.327591091 : f32
    %161 = vector.broadcast %cst_73 : f32 to vector<16x128xf32>
    %162 = arith.mulf %161, %160 : vector<16x128xf32>
    %cst_74 = arith.constant 1.000000e+00 : f32
    %163 = vector.broadcast %cst_74 : f32 to vector<16x128xf32>
    %164 = arith.addf %163, %162 : vector<16x128xf32>
    %cst_75 = arith.constant 1.000000e+00 : f32
    %165 = vector.broadcast %cst_75 : f32 to vector<16x128xf32>
    %166 = arith.divf %165, %164 : vector<16x128xf32>
    %cst_76 = arith.constant 1.06140542 : f32
    %167 = vector.broadcast %cst_76 : f32 to vector<16x128xf32>
    %168 = arith.mulf %167, %166 : vector<16x128xf32>
    %cst_77 = arith.constant -1.45315206 : f32
    %169 = vector.broadcast %cst_77 : f32 to vector<16x128xf32>
    %170 = arith.addf %168, %169 : vector<16x128xf32>
    %171 = arith.mulf %170, %166 : vector<16x128xf32>
    %cst_78 = arith.constant 1.42141378 : f32
    %172 = vector.broadcast %cst_78 : f32 to vector<16x128xf32>
    %173 = arith.addf %171, %172 : vector<16x128xf32>
    %174 = arith.mulf %173, %166 : vector<16x128xf32>
    %cst_79 = arith.constant -0.284496725 : f32
    %175 = vector.broadcast %cst_79 : f32 to vector<16x128xf32>
    %176 = arith.addf %174, %175 : vector<16x128xf32>
    %177 = arith.mulf %176, %166 : vector<16x128xf32>
    %cst_80 = arith.constant 0.254829586 : f32
    %178 = vector.broadcast %cst_80 : f32 to vector<16x128xf32>
    %179 = arith.addf %177, %178 : vector<16x128xf32>
    %180 = arith.mulf %179, %166 : vector<16x128xf32>
    %cst_81 = arith.constant 0.000000e+00 : f32
    %181 = vector.broadcast %cst_81 : f32 to vector<16x128xf32>
    %182 = arith.subf %181, %160 : vector<16x128xf32>
    %183 = arith.mulf %182, %160 : vector<16x128xf32>
    %184 = math.exp %183 : vector<16x128xf32>
    %185 = arith.mulf %180, %184 : vector<16x128xf32>
    %cst_82 = arith.constant 1.000000e+00 : f32
    %186 = vector.broadcast %cst_82 : f32 to vector<16x128xf32>
    %187 = arith.subf %186, %185 : vector<16x128xf32>
    %188 = arith.mulf %159, %187 : vector<16x128xf32>
    %cst_83 = arith.constant 1.000000e+00 : f32
    %189 = vector.broadcast %cst_83 : f32 to vector<16x128xf32>
    %190 = arith.addf %189, %188 : vector<16x128xf32>
    %191 = arith.mulf %152, %190 : vector<16x128xf32>
    %cst_84 = arith.constant dense<0.000000e+00> : vector<16x32xf32>
    %192 = tpu.matmul %191, %24, %cst_84 {dimension_numbers = #tpu.dot_dimension_numbers<[1], [0], [0], [1], [0, 0, 1, 1], [], []>} : vector<16x128xf32>, vector<128x32xf32>, vector<16x32xf32> -> vector<16x32xf32>
    %193 = vector.shape_cast %26 : vector<32xf32> to vector<1x32xf32>
    %194 = vector.broadcast %193 : vector<1x32xf32> to vector<16x32xf32>
    %195 = arith.addf %192, %194 : vector<16x32xf32>
    %196 = arith.addf %124, %195 : vector<16x32xf32>
    %c0_85 = arith.constant 0 : index
    %c0_86 = arith.constant 0 : index
    %197 = vector.load %arg19[%c0_85, %c0_86] : memref<16x32xf32, #tpu.memory_space<vmem>>, vector<16x32xf32>
    tpu.vector_store %arg19[%c0_85, %c0_86], %196 {strides = array<i32>} : memref<16x32xf32, #tpu.memory_space<vmem>>, vector<16x32xf32>,
    %c1_i32 = arith.constant 1 : i32
    %198 = arith.cmpi eq, %arg0, %c1_i32 : i32
    %199 = arith.extui %198 : i1 to i32
    %c0_i32_87 = arith.constant 0 : i32
    %200 = arith.cmpi ne, %199, %c0_i32_87 : i32
    scf.if %200 {
      %201 = vector.extract_strided_slice %196 {offsets = [7, 0], sizes = [1, 32], strides = [1, 1]} : vector<16x32xf32> to vector<1x32xf32>
      %202 = vector.extract_strided_slice %196 {offsets = [15, 0], sizes = [1, 32], strides = [1, 1]} : vector<16x32xf32> to vector<1x32xf32>
      %203 = tpu.concatenate %201, %202 in 0 : vector<1x32xf32>, vector<1x32xf32> -> vector<2x32xf32>
      %c0_88 = arith.constant 0 : index
      %c0_89 = arith.constant 0 : index
      %204 = vector.load %arg15[%c0_88, %c0_89] : memref<1x32xf32, #tpu.memory_space<vmem>>, vector<1x32xf32>
      %205 = vector.shape_cast %204 : vector<1x32xf32> to vector<32xf32>
      %c0_90 = arith.constant 0 : index
      %c0_91 = arith.constant 0 : index
      %206 = vector.load %arg16[%c0_90, %c0_91] : memref<1x32xf32, #tpu.memory_space<vmem>>, vector<1x32xf32>
      %207 = vector.shape_cast %206 : vector<1x32xf32> to vector<32xf32>
      %cst_92 = arith.constant dense<0.000000e+00> : vector<2xf32>
      %208 = vector.multi_reduction <add>, %203, %cst_92 [1] : vector<2x32xf32> to vector<2xf32>
      %209 = vector.shape_cast %208 : vector<2xf32> to vector<2x1xf32>
      %cst_93 = arith.constant 3.200000e+01 : f32
      %210 = vector.broadcast %cst_93 : f32 to vector<2x1xf32>
      %211 = arith.divf %209, %210 : vector<2x1xf32>
      %212 = vector.broadcast %211 : vector<2x1xf32> to vector<2x32xf32>
      %213 = arith.subf %203, %212 : vector<2x32xf32>
      %214 = arith.mulf %213, %213 : vector<2x32xf32>
      %cst_94 = arith.constant dense<0.000000e+00> : vector<2xf32>
      %215 = vector.multi_reduction <add>, %214, %cst_94 [1] : vector<2x32xf32> to vector<2xf32>
      %216 = vector.shape_cast %215 : vector<2xf32> to vector<2x1xf32>
      %cst_95 = arith.constant 3.200000e+01 : f32
      %217 = vector.broadcast %cst_95 : f32 to vector<2x1xf32>
      %218 = arith.divf %216, %217 : vector<2x1xf32>
      %cst_96 = arith.constant 9.99999974E-6 : f32
      %219 = vector.broadcast %cst_96 : f32 to vector<2x1xf32>
      %220 = arith.addf %218, %219 : vector<2x1xf32>
      %221 = math.rsqrt %220 : vector<2x1xf32>
      %222 = vector.broadcast %221 : vector<2x1xf32> to vector<2x32xf32>
      %223 = arith.mulf %213, %222 : vector<2x32xf32>
      %224 = vector.shape_cast %205 : vector<32xf32> to vector<1x32xf32>
      %225 = vector.broadcast %224 : vector<1x32xf32> to vector<2x32xf32>
      %226 = arith.mulf %223, %225 : vector<2x32xf32>
      %227 = vector.shape_cast %207 : vector<32xf32> to vector<1x32xf32>
      %228 = vector.broadcast %227 : vector<1x32xf32> to vector<2x32xf32>
      %229 = arith.addf %226, %228 : vector<2x32xf32>
      %c0_97 = arith.constant 0 : index
      %c0_98 = arith.constant 0 : index
      %230 = vector.load %arg17[%c0_97, %c0_98] : memref<32x128xf32, #tpu.memory_space<vmem>>, vector<32x128xf32>
      %cst_99 = arith.constant dense<0.000000e+00> : vector<2x128xf32>
      %231 = tpu.matmul %229, %230, %cst_99 {dimension_numbers = #tpu.dot_dimension_numbers<[1], [0], [0], [1], [0, 0, 1, 1], [], []>} : vector<2x32xf32>, vector<32x128xf32>, vector<2x128xf32> -> vector<2x128xf32>
      %c0_100 = arith.constant 0 : index
      %c0_101 = arith.constant 0 : index
      %232 = vector.load %arg18[%c0_100, %c0_101] : memref<2x128xf32, #tpu.memory_space<vmem>>, vector<2x128xf32>
      tpu.vector_store %arg18[%c0_100, %c0_101], %231 {strides = array<i32>} : memref<2x128xf32, #tpu.memory_space<vmem>>, vector<2x128xf32>,
    } else {
    }
    return
  }
  func.func @transform_0(%arg0: i32) -> (i32, i32) {
    %c0_i32 = arith.constant 0 : i32
    %c0_i32_0 = arith.constant 0 : i32
    %c0_i32_1 = arith.constant 0 : i32
    return %c0_i32, %c0_i32_0 : i32, i32
  }
  func.func @transform_1(%arg0: i32) -> (i32, i32) {
    %c0_i32 = arith.constant 0 : i32
    %c0_i32_0 = arith.constant 0 : i32
    %c0_i32_1 = arith.constant 0 : i32
    return %c0_i32, %c0_i32_0 : i32, i32
  }
  func.func @transform_2(%arg0: i32) -> (i32, i32, i32) {
    %c0_i32 = arith.constant 0 : i32
    %c0_i32_0 = arith.constant 0 : i32
    %c0_i32_1 = arith.constant 0 : i32
    return %arg0, %c0_i32, %c0_i32_0 : i32, i32, i32
  }
  func.func @transform_3(%arg0: i32) -> (i32, i32, i32) {
    %c0_i32 = arith.constant 0 : i32
    %c0_i32_0 = arith.constant 0 : i32
    %c0_i32_1 = arith.constant 0 : i32
    return %arg0, %c0_i32, %c0_i32_0 : i32, i32, i32
  }
  func.func @transform_4(%arg0: i32) -> (i32, i32, i32) {
    %c0_i32 = arith.constant 0 : i32
    %c0_i32_0 = arith.constant 0 : i32
    %c0_i32_1 = arith.constant 0 : i32
    return %arg0, %c0_i32, %c0_i32_0 : i32, i32, i32
  }
  func.func @transform_5(%arg0: i32) -> (i32, i32, i32) {
    %c0_i32 = arith.constant 0 : i32
    %c0_i32_0 = arith.constant 0 : i32
    %c0_i32_1 = arith.constant 0 : i32
    return %arg0, %c0_i32, %c0_i32_0 : i32, i32, i32
  }
  func.func @transform_6(%arg0: i32) -> (i32, i32, i32) {
    %c0_i32 = arith.constant 0 : i32
    %c0_i32_0 = arith.constant 0 : i32
    %c0_i32_1 = arith.constant 0 : i32
    return %arg0, %c0_i32, %c0_i32_0 : i32, i32, i32
  }
  func.func @transform_7(%arg0: i32) -> (i32, i32, i32) {
    %c0_i32 = arith.constant 0 : i32
    %c0_i32_0 = arith.constant 0 : i32
    %c0_i32_1 = arith.constant 0 : i32
    return %arg0, %c0_i32, %c0_i32_0 : i32, i32, i32
  }
  func.func @transform_8(%arg0: i32) -> (i32, i32, i32) {
    %c0_i32 = arith.constant 0 : i32
    %c0_i32_0 = arith.constant 0 : i32
    %c0_i32_1 = arith.constant 0 : i32
    return %arg0, %c0_i32, %c0_i32_0 : i32, i32, i32
  }
  func.func @transform_9(%arg0: i32) -> (i32, i32, i32) {
    %c0_i32 = arith.constant 0 : i32
    %c0_i32_0 = arith.constant 0 : i32
    %c0_i32_1 = arith.constant 0 : i32
    return %arg0, %c0_i32, %c0_i32_0 : i32, i32, i32
  }
  func.func @transform_10(%arg0: i32) -> (i32, i32, i32) {
    %c0_i32 = arith.constant 0 : i32
    %c0_i32_0 = arith.constant 0 : i32
    %c0_i32_1 = arith.constant 0 : i32
    return %arg0, %c0_i32, %c0_i32_0 : i32, i32, i32
  }
  func.func @transform_11(%arg0: i32) -> (i32, i32, i32) {
    %c0_i32 = arith.constant 0 : i32
    %c0_i32_0 = arith.constant 0 : i32
    %c0_i32_1 = arith.constant 0 : i32
    return %arg0, %c0_i32, %c0_i32_0 : i32, i32, i32
  }
  func.func @transform_12(%arg0: i32) -> (i32, i32, i32) {
    %c0_i32 = arith.constant 0 : i32
    %c0_i32_0 = arith.constant 0 : i32
    %c0_i32_1 = arith.constant 0 : i32
    return %arg0, %c0_i32, %c0_i32_0 : i32, i32, i32
  }
  func.func @transform_13(%arg0: i32) -> (i32, i32, i32) {
    %c0_i32 = arith.constant 0 : i32
    %c0_i32_0 = arith.constant 0 : i32
    %c0_i32_1 = arith.constant 0 : i32
    return %arg0, %c0_i32, %c0_i32_0 : i32, i32, i32
  }
  func.func @transform_14(%arg0: i32) -> (i32, i32) {
    %c0_i32 = arith.constant 0 : i32
    %c0_i32_0 = arith.constant 0 : i32
    %c0_i32_1 = arith.constant 0 : i32
    return %c0_i32, %c0_i32_0 : i32, i32
  }
  func.func @transform_15(%arg0: i32) -> (i32, i32) {
    %c0_i32 = arith.constant 0 : i32
    %c0_i32_0 = arith.constant 0 : i32
    %c0_i32_1 = arith.constant 0 : i32
    return %c0_i32, %c0_i32_0 : i32, i32
  }
  func.func @transform_16(%arg0: i32) -> (i32, i32) {
    %c0_i32 = arith.constant 0 : i32
    %c0_i32_0 = arith.constant 0 : i32
    %c0_i32_1 = arith.constant 0 : i32
    return %c0_i32, %c0_i32_0 : i32, i32
  }
  func.func @transform_17(%arg0: i32) -> (i32, i32) {
    %c0_i32 = arith.constant 0 : i32
    %c0_i32_0 = arith.constant 0 : i32
    %c0_i32_1 = arith.constant 0 : i32
    return %c0_i32, %c0_i32_0 : i32, i32
  }
}

</mosaic_0001>

<llo_original>
// kernel: tpu_custom_call.1
$region0: #{tpu_custom_call.1}
  #allocation0 [shape = 'u32[]', space=smem, size = 0x4, offset = 0x4, fixed_abs, tag = 'smem constant byte address 0x4 - core index']
  #allocation1 [shape = 'u32[144,128]{1,0:T(1,128)}', space=vmem, size = 0x12000, scoped, tag = 'internal scratch']
  #allocation2 [shape = 'f32[16,32]{1,0:T(8,128)}', space=vmem, size = 0x2000, scoped, tag = 'scratch operand']
  %s0 = inlined_call_operand.vmem [shape: f32[16,32], index: 0, kind: input, shape index: {}]
  %s1 = inlined_call_operand.vmem [shape: f32[16,16], index: 1, kind: input, shape index: {}]
  %s2 = inlined_call_operand.vmem [shape: f32[2,1,32], index: 2, kind: input, shape index: {}]
  %s3 = inlined_call_operand.vmem [shape: f32[2,1,32], index: 3, kind: input, shape index: {}]
  %s4 = inlined_call_operand.vmem [shape: f32[2,32,96], index: 4, kind: input, shape index: {}]
  %s5 = inlined_call_operand.vmem [shape: f32[2,1,96], index: 5, kind: input, shape index: {}]
  %s6 = inlined_call_operand.vmem [shape: f32[2,32,32], index: 6, kind: input, shape index: {}]
  %s7 = inlined_call_operand.vmem [shape: f32[2,1,32], index: 7, kind: input, shape index: {}]
  %s8 = inlined_call_operand.vmem [shape: f32[2,1,32], index: 8, kind: input, shape index: {}]
  %s9 = inlined_call_operand.vmem [shape: f32[2,1,32], index: 9, kind: input, shape index: {}]
  %s10 = inlined_call_operand.vmem [shape: f32[2,32,128], index: 10, kind: input, shape index: {}]
  %s11 = inlined_call_operand.vmem [shape: f32[2,1,128], index: 11, kind: input, shape index: {}]
  %s12 = inlined_call_operand.vmem [shape: f32[2,128,32], index: 12, kind: input, shape index: {}]
  %s13 = inlined_call_operand.vmem [shape: f32[2,1,32], index: 13, kind: input, shape index: {}]
  %s14 = inlined_call_operand.vmem [shape: f32[1,32], index: 14, kind: input, shape index: {}]
  %s15 = inlined_call_operand.vmem [shape: f32[1,32], index: 15, kind: input, shape index: {}]
  %s16 = inlined_call_operand.vmem [shape: f32[32,128], index: 16, kind: input, shape index: {}]
  %s17 = inlined_call_operand.hbm [shape: f32[2,128], index: 17, kind: output, shape index: {}]
  %s18 = sld [smem:[#allocation0]]
  $region109: #{tpu_custom_call.1} parent=0
    _
  %s20 = ssub.s32 1, %s18
  %s21 = scalar_select 0, %s20, %s18
  $region1: #{tpu_custom_call.1} parent=0
    #allocation3 [shape = 'u8[1024]{0}', space=vmem, size = 0x400, scoped, tag = 'output window, operand 0, single buffered']
    #allocation4 [shape = 's32[2]{0}', space=sflag, size = 0x8, scoped, tag = 'scoped memory for tpu_custom_call.1']
    %22 = vsyncpa [#allocation4], 0
    loop: start=0, step=1, limit=4
    $region2: #{tpu_custom_call.1} parent=1 // loop_pre_header
      _
    $region3: #{tpu_custom_call.1} parent=1 // loop_header
      %s24 = sphi 0, %s28
      %p25 = scmp.ge.s32.totalorder %s24, 4
      %s32 = sphi 0, %s32
      %s34 = sphi 0, %s32
      %s35 = sphi 0, %s34
      %s49 = sphi 0, %s35
      %s53 = sphi 0, %s53
      %s55 = sphi 0, %s53
      %s56 = sphi 0, %s55
      %s70 = sphi 0, %s56
      %s76 = sphi 0, %s78
      %s79 = sphi 0, %s76
      %s80 = sphi 0, %s79
      %s96 = sphi 0, %s80
      %s102 = sphi 0, %s104
      %s105 = sphi 0, %s102
      %s106 = sphi 0, %s105
      %s122 = sphi 0, %s106
      %s128 = sphi 0, %s130
      %s131 = sphi 0, %s128
      %s132 = sphi 0, %s131
      %s148 = sphi 0, %s132
      %s154 = sphi 0, %s156
      %s157 = sphi 0, %s154
      %s158 = sphi 0, %s157
      %s174 = sphi 0, %s158
      %s180 = sphi 0, %s182
      %s183 = sphi 0, %s180
      %s184 = sphi 0, %s183
      %s200 = sphi 0, %s184
      %s206 = sphi 0, %s208
      %s209 = sphi 0, %s206
      %s210 = sphi 0, %s209
      %s226 = sphi 0, %s210
      %s232 = sphi 0, %s234
      %s235 = sphi 0, %s232
      %s236 = sphi 0, %s235
      %s252 = sphi 0, %s236
      %s258 = sphi 0, %s260
      %s261 = sphi 0, %s258
      %s262 = sphi 0, %s261
      %s278 = sphi 0, %s262
      %s284 = sphi 0, %s286
      %s287 = sphi 0, %s284
      %s288 = sphi 0, %s287
      %s304 = sphi 0, %s288
      %s310 = sphi 0, %s312
      %s313 = sphi 0, %s310
      %s314 = sphi 0, %s313
      %s330 = sphi 0, %s314
      %s336 = sphi 0, %s338
      %s339 = sphi 0, %s336
      %s340 = sphi 0, %s339
      %s356 = sphi 0, %s340
      %s362 = sphi 0, %s364
      %s365 = sphi 0, %s362
      %s366 = sphi 0, %s365
      %s382 = sphi 0, %s366
      %s386 = sphi 0, %s386
      %s388 = sphi 0, %s386
      %s389 = sphi 0, %s388
      %s403 = sphi 0, %s389
      %s407 = sphi 0, %s407
      %s409 = sphi 0, %s407
      %s410 = sphi 0, %s409
      %s424 = sphi 0, %s410
      %s428 = sphi 0, %s428
      %s430 = sphi 0, %s428
      %s431 = sphi 0, %s430
      %s445 = sphi 0, %s431
      %s449 = sphi 0, %s449
      %s451 = sphi 0, %s449
      %s452 = sphi 0, %s451
      %s466 = sphi 0, %s452
    $region4: #{tpu_custom_call.1} parent=1 // loop_header_branch
      %27 = sbr.rel (%p25) target = $region8
    $region5: #{tpu_custom_call.1} parent=1 // loop_body
      %s29 = ssub.s32 %s24, 1
      %s30 = ssub.s32 %s24, 2
      %s31 = sadd.s32 %s24, 1
      %s33 = sadd.s32 %s32, 1
      %p36 = scmp.eq.s32.totalorder %s24, 1
      %p37 = scmp.ne.s32.totalorder %s32, %s34
      %p38 = scmp.eq.s32.totalorder %s24, 0
      %p39 = por %p37, %p38
      %p40 = scmp.ne.s32.totalorder %s32, %s34
      %p41 = scmp.eq.s32.totalorder %s29, 1
      %p42 = por %p40, %p41
      %p43 = scmp.ne.s32.totalorder %s34, %s35
      %p44 = scmp.eq.s32.totalorder %s29, 0
      %p45 = por %p43, %p44
      %p46 = scmp.ne.s32.totalorder %s34, %s35
      %p47 = scmp.eq.s32.totalorder %s30, 1
      %p48 = por %p46, %p47
      %p50 = scmp.ne.s32.totalorder %s35, %s49
      %p51 = scmp.eq.s32.totalorder %s30, 0
      %p52 = por %p50, %p51
      %s54 = sadd.s32 %s53, 1
      %p57 = scmp.eq.s32.totalorder %s24, 1
      %p58 = scmp.ne.s32.totalorder %s53, %s55
      %p59 = scmp.eq.s32.totalorder %s24, 0
      %p60 = por %p58, %p59
      %p61 = scmp.ne.s32.totalorder %s53, %s55
      %p62 = scmp.eq.s32.totalorder %s29, 1
      %p63 = por %p61, %p62
      %p64 = scmp.ne.s32.totalorder %s55, %s56
      %p65 = scmp.eq.s32.totalorder %s29, 0
      %p66 = por %p64, %p65
      %p67 = scmp.ne.s32.totalorder %s55, %s56
      %p68 = scmp.eq.s32.totalorder %s30, 1
      %p69 = por %p67, %p68
      %p71 = scmp.ne.s32.totalorder %s56, %s70
      %p72 = scmp.eq.s32.totalorder %s30, 0
      %p73 = por %p71, %p72
      %s74 = ssub.s32 %s24, %s31
      %p75 = scmp.eq.s32.totalorder %s74, 0
      %s77 = sadd.s32 %s76, 1
      %s78 = scalar_select %p75, %s76, %s77
      %p81 = pneg %p75
      %p82 = scmp.eq.s32.totalorder %s24, 1
      %p83 = por %p81, %p82
      %p84 = scmp.ne.s32.totalorder %s76, %s79
      %p85 = scmp.eq.s32.totalorder %s24, 0
      %p86 = por %p84, %p85
      %p87 = scmp.ne.s32.totalorder %s76, %s79
      %p88 = scmp.eq.s32.totalorder %s29, 1
      %p89 = por %p87, %p88
      %p90 = scmp.ne.s32.totalorder %s79, %s80
      %p91 = scmp.eq.s32.totalorder %s29, 0
      %p92 = por %p90, %p91
      %p93 = scmp.ne.s32.totalorder %s79, %s80
      %p94 = scmp.eq.s32.totalorder %s30, 1
      %p95 = por %p93, %p94
      %p97 = scmp.ne.s32.totalorder %s80, %s96
      %p98 = scmp.eq.s32.totalorder %s30, 0
      %p99 = por %p97, %p98
      %s100 = ssub.s32 %s24, %s31
      %p101 = scmp.eq.s32.totalorder %s100, 0
      %s103 = sadd.s32 %s102, 1
      %s104 = scalar_select %p101, %s102, %s103
      %p107 = pneg %p101
      %p108 = scmp.eq.s32.totalorder %s24, 1
      %p109 = por %p107, %p108
      %p110 = scmp.ne.s32.totalorder %s102, %s105
      %p111 = scmp.eq.s32.totalorder %s24, 0
      %p112 = por %p110, %p111
      %p113 = scmp.ne.s32.totalorder %s102, %s105
      %p114 = scmp.eq.s32.totalorder %s29, 1
      %p115 = por %p113, %p114
      %p116 = scmp.ne.s32.totalorder %s105, %s106
      %p117 = scmp.eq.s32.totalorder %s29, 0
      %p118 = por %p116, %p117
      %p119 = scmp.ne.s32.totalorder %s105, %s106
      %p120 = scmp.eq.s32.totalorder %s30, 1
      %p121 = por %p119, %p120
      %p123 = scmp.ne.s32.totalorder %s106, %s122
      %p124 = scmp.eq.s32.totalorder %s30, 0
      %p125 = por %p123, %p124
      %s126 = ssub.s32 %s24, %s31
      %p127 = scmp.eq.s32.totalorder %s126, 0
      %s129 = sadd.s32 %s128, 1
      %s130 = scalar_select %p127, %s128, %s129
      %p133 = pneg %p127
      %p134 = scmp.eq.s32.totalorder %s24, 1
      %p135 = por %p133, %p134
      %p136 = scmp.ne.s32.totalorder %s128, %s131
      %p137 = scmp.eq.s32.totalorder %s24, 0
      %p138 = por %p136, %p137
      %p139 = scmp.ne.s32.totalorder %s128, %s131
      %p140 = scmp.eq.s32.totalorder %s29, 1
      %p141 = por %p139, %p140
      %p142 = scmp.ne.s32.totalorder %s131, %s132
      %p143 = scmp.eq.s32.totalorder %s29, 0
      %p144 = por %p142, %p143
      %p145 = scmp.ne.s32.totalorder %s131, %s132
      %p146 = scmp.eq.s32.totalorder %s30, 1
      %p147 = por %p145, %p146
      %p149 = scmp.ne.s32.totalorder %s132, %s148
      %p150 = scmp.eq.s32.totalorder %s30, 0
      %p151 = por %p149, %p150
      %s152 = ssub.s32 %s24, %s31
      %p153 = scmp.eq.s32.totalorder %s152, 0
      %s155 = sadd.s32 %s154, 1
      %s156 = scalar_select %p153, %s154, %s155
      %p159 = pneg %p153
      %p160 = scmp.eq.s32.totalorder %s24, 1
      %p161 = por %p159, %p160
      %p162 = scmp.ne.s32.totalorder %s154, %s157
      %p163 = scmp.eq.s32.totalorder %s24, 0
      %p164 = por %p162, %p163
      %p165 = scmp.ne.s32.totalorder %s154, %s157
      %p166 = scmp.eq.s32.totalorder %s29, 1
      %p167 = por %p165, %p166
      %p168 = scmp.ne.s32.totalorder %s157, %s158
      %p169 = scmp.eq.s32.totalorder %s29, 0
      %p170 = por %p168, %p169
      %p171 = scmp.ne.s32.totalorder %s157, %s158
      %p172 = scmp.eq.s32.totalorder %s30, 1
      %p173 = por %p171, %p172
      %p175 = scmp.ne.s32.totalorder %s158, %s174
      %p176 = scmp.eq.s32.totalorder %s30, 0
      %p177 = por %p175, %p176
      %s178 = ssub.s32 %s24, %s31
      %p179 = scmp.eq.s32.totalorder %s178, 0
      %s181 = sadd.s32 %s180, 1
      %s182 = scalar_select %p179, %s180, %s181
      %p185 = pneg %p179
      %p186 = scmp.eq.s32.totalorder %s24, 1
      %p187 = por %p185, %p186
      %p188 = scmp.ne.s32.totalorder %s180, %s183
      %p189 = scmp.eq.s32.totalorder %s24, 0
      %p190 = por %p188, %p189
      %p191 = scmp.ne.s32.totalorder %s180, %s183
      %p192 = scmp.eq.s32.totalorder %s29, 1
      %p193 = por %p191, %p192
      %p194 = scmp.ne.s32.totalorder %s183, %s184
      %p195 = scmp.eq.s32.totalorder %s29, 0
      %p196 = por %p194, %p195
      %p197 = scmp.ne.s32.totalorder %s183, %s184
      %p198 = scmp.eq.s32.totalorder %s30, 1
      %p199 = por %p197, %p198
      %p201 = scmp.ne.s32.totalorder %s184, %s200
      %p202 = scmp.eq.s32.totalorder %s30, 0
      %p203 = por %p201, %p202
      %s204 = ssub.s32 %s24, %s31
      %p205 = scmp.eq.s32.totalorder %s204, 0
      %s207 = sadd.s32 %s206, 1
      %s208 = scalar_select %p205, %s206, %s207
      %p211 = pneg %p205
      %p212 = scmp.eq.s32.totalorder %s24, 1
      %p213 = por %p211, %p212
      %p214 = scmp.ne.s32.totalorder %s206, %s209
      %p215 = scmp.eq.s32.totalorder %s24, 0
      %p216 = por %p214, %p215
      %p217 = scmp.ne.s32.totalorder %s206, %s209
      %p218 = scmp.eq.s32.totalorder %s29, 1
      %p219 = por %p217, %p218
      %p220 = scmp.ne.s32.totalorder %s209, %s210
      %p221 = scmp.eq.s32.totalorder %s29, 0
      %p222 = por %p220, %p221
      %p223 = scmp.ne.s32.totalorder %s209, %s210
      %p224 = scmp.eq.s32.totalorder %s30, 1
      %p225 = por %p223, %p224
      %p227 = scmp.ne.s32.totalorder %s210, %s226
      %p228 = scmp.eq.s32.totalorder %s30, 0
      %p229 = por %p227, %p228
      %s230 = ssub.s32 %s24, %s31
      %p231 = scmp.eq.s32.totalorder %s230, 0
      %s233 = sadd.s32 %s232, 1
      %s234 = scalar_select %p231, %s232, %s233
      %p237 = pneg %p231
      %p238 = scmp.eq.s32.totalorder %s24, 1
      %p239 = por %p237, %p238
      %p240 = scmp.ne.s32.totalorder %s232, %s235
      %p241 = scmp.eq.s32.totalorder %s24, 0
      %p242 = por %p240, %p241
      %p243 = scmp.ne.s32.totalorder %s232, %s235
      %p244 = scmp.eq.s32.totalorder %s29, 1
      %p245 = por %p243, %p244
      %p246 = scmp.ne.s32.totalorder %s235, %s236
      %p247 = scmp.eq.s32.totalorder %s29, 0
      %p248 = por %p246, %p247
      %p249 = scmp.ne.s32.totalorder %s235, %s236
      %p250 = scmp.eq.s32.totalorder %s30, 1
      %p251 = por %p249, %p250
      %p253 = scmp.ne.s32.totalorder %s236, %s252
      %p254 = scmp.eq.s32.totalorder %s30, 0
      %p255 = por %p253, %p254
      %s256 = ssub.s32 %s24, %s31
      %p257 = scmp.eq.s32.totalorder %s256, 0
      %s259 = sadd.s32 %s258, 1
      %s260 = scalar_select %p257, %s258, %s259
      %p263 = pneg %p257
      %p264 = scmp.eq.s32.totalorder %s24, 1
      %p265 = por %p263, %p264
      %p266 = scmp.ne.s32.totalorder %s258, %s261
      %p267 = scmp.eq.s32.totalorder %s24, 0
      %p268 = por %p266, %p267
      %p269 = scmp.ne.s32.totalorder %s258, %s261
      %p270 = scmp.eq.s32.totalorder %s29, 1
      %p271 = por %p269, %p270
      %p272 = scmp.ne.s32.totalorder %s261, %s262
      %p273 = scmp.eq.s32.totalorder %s29, 0
      %p274 = por %p272, %p273
      %p275 = scmp.ne.s32.totalorder %s261, %s262
      %p276 = scmp.eq.s32.totalorder %s30, 1
      %p277 = por %p275, %p276
      %p279 = scmp.ne.s32.totalorder %s262, %s278
      %p280 = scmp.eq.s32.totalorder %s30, 0
      %p281 = por %p279, %p280
      %s282 = ssub.s32 %s24, %s31
      %p283 = scmp.eq.s32.totalorder %s282, 0
      %s285 = sadd.s32 %s284, 1
      %s286 = scalar_select %p283, %s284, %s285
      %p289 = pneg %p283
      %p290 = scmp.eq.s32.totalorder %s24, 1
      %p291 = por %p289, %p290
      %p292 = scmp.ne.s32.totalorder %s284, %s287
      %p293 = scmp.eq.s32.totalorder %s24, 0
      %p294 = por %p292, %p293
      %p295 = scmp.ne.s32.totalorder %s284, %s287
      %p296 = scmp.eq.s32.totalorder %s29, 1
      %p297 = por %p295, %p296
      %p298 = scmp.ne.s32.totalorder %s287, %s288
      %p299 = scmp.eq.s32.totalorder %s29, 0
      %p300 = por %p298, %p299
      %p301 = scmp.ne.s32.totalorder %s287, %s288
      %p302 = scmp.eq.s32.totalorder %s30, 1
      %p303 = por %p301, %p302
      %p305 = scmp.ne.s32.totalorder %s288, %s304
      %p306 = scmp.eq.s32.totalorder %s30, 0
      %p307 = por %p305, %p306
      %s308 = ssub.s32 %s24, %s31
      %p309 = scmp.eq.s32.totalorder %s308, 0
      %s311 = sadd.s32 %s310, 1
      %s312 = scalar_select %p309, %s310, %s311
      %p315 = pneg %p309
      %p316 = scmp.eq.s32.totalorder %s24, 1
      %p317 = por %p315, %p316
      %p318 = scmp.ne.s32.totalorder %s310, %s313
      %p319 = scmp.eq.s32.totalorder %s24, 0
      %p320 = por %p318, %p319
      %p321 = scmp.ne.s32.totalorder %s310, %s313
      %p322 = scmp.eq.s32.totalorder %s29, 1
      %p323 = por %p321, %p322
      %p324 = scmp.ne.s32.totalorder %s313, %s314
      %p325 = scmp.eq.s32.totalorder %s29, 0
      %p326 = por %p324, %p325
      %p327 = scmp.ne.s32.totalorder %s313, %s314
      %p328 = scmp.eq.s32.totalorder %s30, 1
      %p329 = por %p327, %p328
      %p331 = scmp.ne.s32.totalorder %s314, %s330
      %p332 = scmp.eq.s32.totalorder %s30, 0
      %p333 = por %p331, %p332
      %s334 = ssub.s32 %s24, %s31
      %p335 = scmp.eq.s32.totalorder %s334, 0
      %s337 = sadd.s32 %s336, 1
      %s338 = scalar_select %p335, %s336, %s337
      %p341 = pneg %p335
      %p342 = scmp.eq.s32.totalorder %s24, 1
      %p343 = por %p341, %p342
      %p344 = scmp.ne.s32.totalorder %s336, %s339
      %p345 = scmp.eq.s32.totalorder %s24, 0
      %p346 = por %p344, %p345
      %p347 = scmp.ne.s32.totalorder %s336, %s339
      %p348 = scmp.eq.s32.totalorder %s29, 1
      %p349 = por %p347, %p348
      %p350 = scmp.ne.s32.totalorder %s339, %s340
      %p351 = scmp.eq.s32.totalorder %s29, 0
      %p352 = por %p350, %p351
      %p353 = scmp.ne.s32.totalorder %s339, %s340
      %p354 = scmp.eq.s32.totalorder %s30, 1
      %p355 = por %p353, %p354
      %p357 = scmp.ne.s32.totalorder %s340, %s356
      %p358 = scmp.eq.s32.totalorder %s30, 0
      %p359 = por %p357, %p358
      %s360 = ssub.s32 %s24, %s31
      %p361 = scmp.eq.s32.totalorder %s360, 0
      %s363 = sadd.s32 %s362, 1
      %s364 = scalar_select %p361, %s362, %s363
      %p367 = pneg %p361
      %p368 = scmp.eq.s32.totalorder %s24, 1
      %p369 = por %p367, %p368
      %p370 = scmp.ne.s32.totalorder %s362, %s365
      %p371 = scmp.eq.s32.totalorder %s24, 0
      %p372 = por %p370, %p371
      %p373 = scmp.ne.s32.totalorder %s362, %s365
      %p374 = scmp.eq.s32.totalorder %s29, 1
      %p375 = por %p373, %p374
      %p376 = scmp.ne.s32.totalorder %s365, %s366
      %p377 = scmp.eq.s32.totalorder %s29, 0
      %p378 = por %p376, %p377
      %p379 = scmp.ne.s32.totalorder %s365, %s366
      %p380 = scmp.eq.s32.totalorder %s30, 1
      %p381 = por %p379, %p380
      %p383 = scmp.ne.s32.totalorder %s366, %s382
      %p384 = scmp.eq.s32.totalorder %s30, 0
      %p385 = por %p383, %p384
      %s387 = sadd.s32 %s386, 1
      %p390 = scmp.eq.s32.totalorder %s24, 1
      %p391 = scmp.ne.s32.totalorder %s386, %s388
      %p392 = scmp.eq.s32.totalorder %s24, 0
      %p393 = por %p391, %p392
      %p394 = scmp.ne.s32.totalorder %s386, %s388
      %p395 = scmp.eq.s32.totalorder %s29, 1
      %p396 = por %p394, %p395
      %p397 = scmp.ne.s32.totalorder %s388, %s389
      %p398 = scmp.eq.s32.totalorder %s29, 0
      %p399 = por %p397, %p398
      %p400 = scmp.ne.s32.totalorder %s388, %s389
      %p401 = scmp.eq.s32.totalorder %s30, 1
      %p402 = por %p400, %p401
      %p404 = scmp.ne.s32.totalorder %s389, %s403
      %p405 = scmp.eq.s32.totalorder %s30, 0
      %p406 = por %p404, %p405
      %s408 = sadd.s32 %s407, 1
      %p411 = scmp.eq.s32.totalorder %s24, 1
      %p412 = scmp.ne.s32.totalorder %s407, %s409
      %p413 = scmp.eq.s32.totalorder %s24, 0
      %p414 = por %p412, %p413
      %p415 = scmp.ne.s32.totalorder %s407, %s409
      %p416 = scmp.eq.s32.totalorder %s29, 1
      %p417 = por %p415, %p416
      %p418 = scmp.ne.s32.totalorder %s409, %s410
      %p419 = scmp.eq.s32.totalorder %s29, 0
      %p420 = por %p418, %p419
      %p421 = scmp.ne.s32.totalorder %s409, %s410
      %p422 = scmp.eq.s32.totalorder %s30, 1
      %p423 = por %p421, %p422
      %p425 = scmp.ne.s32.totalorder %s410, %s424
      %p426 = scmp.eq.s32.totalorder %s30, 0
      %p427 = por %p425, %p426
      %s429 = sadd.s32 %s428, 1
      %p432 = scmp.eq.s32.totalorder %s24, 1
      %p433 = scmp.ne.s32.totalorder %s428, %s430
      %p434 = scmp.eq.s32.totalorder %s24, 0
      %p435 = por %p433, %p434
      %p436 = scmp.ne.s32.totalorder %s428, %s430
      %p437 = scmp.eq.s32.totalorder %s29, 1
      %p438 = por %p436, %p437
      %p439 = scmp.ne.s32.totalorder %s430, %s431
      %p440 = scmp.eq.s32.totalorder %s29, 0
      %p441 = por %p439, %p440
      %p442 = scmp.ne.s32.totalorder %s430, %s431
      %p443 = scmp.eq.s32.totalorder %s30, 1
      %p444 = por %p442, %p443
      %p446 = scmp.ne.s32.totalorder %s431, %s445
      %p447 = scmp.eq.s32.totalorder %s30, 0
      %p448 = por %p446, %p447
      %s450 = sadd.s32 %s449, 1
      %p453 = scmp.eq.s32.totalorder %s24, 1
      %p454 = scmp.ne.s32.totalorder %s449, %s451
      %p455 = scmp.eq.s32.totalorder %s24, 0
      %p456 = por %p454, %p455
      %p457 = scmp.ne.s32.totalorder %s449, %s451
      %p458 = scmp.eq.s32.totalorder %s29, 1
      %p459 = por %p457, %p458
      %p460 = scmp.ne.s32.totalorder %s451, %s452
      %p461 = scmp.eq.s32.totalorder %s29, 0
      %p462 = por %p460, %p461
      %p463 = scmp.ne.s32.totalorder %s451, %s452
      %p464 = scmp.eq.s32.totalorder %s30, 1
      %p465 = por %p463, %p464
      %p467 = scmp.ne.s32.totalorder %s452, %s466
      %p468 = scmp.eq.s32.totalorder %s30, 0
      %p469 = por %p467, %p468
      %p470 = scmp.le.s32.totalorder 1, %s24
      %p471 = scmp.lt.s32.totalorder %s24, 3
      %p472 = pnand %p470, %p471
      %p473 = pneg %p472
      // Predicated region
      $region9: #{tpu_custom_call.1} parent=5 // pred_check
        _
      $region10: #{tpu_custom_call.1} parent=5 // pred_check_branch
        %475 = sbr.rel (%p472) target = $region12
      $region11: #{tpu_custom_call.1} parent=5 // pred_region
        %s476 = ssub.s32 %s24, 1
        // Predicated region
        $region13: #{tpu_custom_call.1} parent=11 // pred_check
          %p477 = pneg %p45
        $region14: #{tpu_custom_call.1} parent=11 // pred_check_branch
          %479 = sbr.rel (%p477) target = $region16
        $region15: #{tpu_custom_call.1} parent=11 // pred_region
          _
        $region16: #{tpu_custom_call.1} parent=11 // pred_fallthru
          _
        // Predicated region
        $region17: #{tpu_custom_call.1} parent=11 // pred_check
          %p480 = pneg %p66
        $region18: #{tpu_custom_call.1} parent=11 // pred_check_branch
          %482 = sbr.rel (%p480) target = $region20
        $region19: #{tpu_custom_call.1} parent=11 // pred_region
          _
        $region20: #{tpu_custom_call.1} parent=11 // pred_fallthru
          _
        // Predicated region
        $region21: #{tpu_custom_call.1} parent=11 // pred_check
          %p483 = pneg %p399
        $region22: #{tpu_custom_call.1} parent=11 // pred_check_branch
          %485 = sbr.rel (%p483) target = $region24
        $region23: #{tpu_custom_call.1} parent=11 // pred_region
          _
        $region24: #{tpu_custom_call.1} parent=11 // pred_fallthru
          _
        // Predicated region
        $region25: #{tpu_custom_call.1} parent=11 // pred_check
          %p486 = pneg %p420
        $region26: #{tpu_custom_call.1} parent=11 // pred_check_branch
          %488 = sbr.rel (%p486) target = $region28
        $region27: #{tpu_custom_call.1} parent=11 // pred_region
          _
        $region28: #{tpu_custom_call.1} parent=11 // pred_fallthru
          _
        // Predicated region
        $region29: #{tpu_custom_call.1} parent=11 // pred_check
          %p489 = pneg %p441
        $region30: #{tpu_custom_call.1} parent=11 // pred_check_branch
          %491 = sbr.rel (%p489) target = $region32
        $region31: #{tpu_custom_call.1} parent=11 // pred_region
          _
        $region32: #{tpu_custom_call.1} parent=11 // pred_fallthru
          _
      $region12: #{tpu_custom_call.1} parent=5 // pred_fallthru
        _
      %p492 = scmp.lt.s32.totalorder %s24, 2
      // Predicated region
      $region33: #{tpu_custom_call.1} parent=5 // pred_check
        %p493 = pneg %p492
      $region34: #{tpu_custom_call.1} parent=5 // pred_check_branch
        %495 = sbr.rel (%p493) target = $region36
      $region35: #{tpu_custom_call.1} parent=5 // pred_region
        // Predicated region
        $region37: #{tpu_custom_call.1} parent=35 // pred_check
          %p496 = pneg %p86
        $region38: #{tpu_custom_call.1} parent=35 // pred_check_branch
          %498 = sbr.rel (%p496) target = $region40
        $region39: #{tpu_custom_call.1} parent=35 // pred_region
          %p499 = scmp.lt.s32.totalorder %s24, 1
          %s500 = scalar_select %p499, %s24, 1
          %s501 = scalar_lea.vmem %s2, %s500
        $region40: #{tpu_custom_call.1} parent=35 // pred_fallthru
          _
        // Predicated region
        $region41: #{tpu_custom_call.1} parent=35 // pred_check
          %p502 = pneg %p112
        $region42: #{tpu_custom_call.1} parent=35 // pred_check_branch
          %504 = sbr.rel (%p502) target = $region44
        $region43: #{tpu_custom_call.1} parent=35 // pred_region
          %p505 = scmp.lt.s32.totalorder %s24, 1
          %s506 = scalar_select %p505, %s24, 1
          %s507 = scalar_lea.vmem %s3, %s506
        $region44: #{tpu_custom_call.1} parent=35 // pred_fallthru
          _
        // Predicated region
        $region45: #{tpu_custom_call.1} parent=35 // pred_check
          %p508 = pneg %p138
        $region46: #{tpu_custom_call.1} parent=35 // pred_check_branch
          %510 = sbr.rel (%p508) target = $region48
        $region47: #{tpu_custom_call.1} parent=35 // pred_region
          %p511 = scmp.lt.s32.totalorder %s24, 1
          %s512 = scalar_select %p511, %s24, 1
          %s513 = smul.addr %s512, 4
          %s514 = smul.addr %s513, 8
          %s515 = scalar_lea.vmem %s4, %s514
        $region48: #{tpu_custom_call.1} parent=35 // pred_fallthru
          _
        // Predicated region
        $region49: #{tpu_custom_call.1} parent=35 // pred_check
          %p516 = pneg %p164
        $region50: #{tpu_custom_call.1} parent=35 // pred_check_branch
          %518 = sbr.rel (%p516) target = $region52
        $region51: #{tpu_custom_call.1} parent=35 // pred_region
          %p519 = scmp.lt.s32.totalorder %s24, 1
          %s520 = scalar_select %p519, %s24, 1
          %s521 = scalar_lea.vmem %s5, %s520
        $region52: #{tpu_custom_call.1} parent=35 // pred_fallthru
          _
        // Predicated region
        $region53: #{tpu_custom_call.1} parent=35 // pred_check
          %p522 = pneg %p190
        $region54: #{tpu_custom_call.1} parent=35 // pred_check_branch
          %524 = sbr.rel (%p522) target = $region56
        $region55: #{tpu_custom_call.1} parent=35 // pred_region
          %p525 = scmp.lt.s32.totalorder %s24, 1
          %s526 = scalar_select %p525, %s24, 1
          %s527 = smul.addr %s526, 4
          %s528 = smul.addr %s527, 8
          %s529 = scalar_lea.vmem %s6, %s528
        $region56: #{tpu_custom_call.1} parent=35 // pred_fallthru
          _
        // Predicated region
        $region57: #{tpu_custom_call.1} parent=35 // pred_check
          %p530 = pneg %p216
        $region58: #{tpu_custom_call.1} parent=35 // pred_check_branch
          %532 = sbr.rel (%p530) target = $region60
        $region59: #{tpu_custom_call.1} parent=35 // pred_region
          %p533 = scmp.lt.s32.totalorder %s24, 1
          %s534 = scalar_select %p533, %s24, 1
          %s535 = scalar_lea.vmem %s7, %s534
        $region60: #{tpu_custom_call.1} parent=35 // pred_fallthru
          _
        // Predicated region
        $region61: #{tpu_custom_call.1} parent=35 // pred_check
          %p536 = pneg %p242
        $region62: #{tpu_custom_call.1} parent=35 // pred_check_branch
          %538 = sbr.rel (%p536) target = $region64
        $region63: #{tpu_custom_call.1} parent=35 // pred_region
          %p539 = scmp.lt.s32.totalorder %s24, 1
          %s540 = scalar_select %p539, %s24, 1
          %s541 = scalar_lea.vmem %s8, %s540
        $region64: #{tpu_custom_call.1} parent=35 // pred_fallthru
          _
        // Predicated region
        $region65: #{tpu_custom_call.1} parent=35 // pred_check
          %p542 = pneg %p268
        $region66: #{tpu_custom_call.1} parent=35 // pred_check_branch
          %544 = sbr.rel (%p542) target = $region68
        $region67: #{tpu_custom_call.1} parent=35 // pred_region
          %p545 = scmp.lt.s32.totalorder %s24, 1
          %s546 = scalar_select %p545, %s24, 1
          %s547 = scalar_lea.vmem %s9, %s546
        $region68: #{tpu_custom_call.1} parent=35 // pred_fallthru
          _
        // Predicated region
        $region69: #{tpu_custom_call.1} parent=35 // pred_check
          %p548 = pneg %p294
        $region70: #{tpu_custom_call.1} parent=35 // pred_check_branch
          %550 = sbr.rel (%p548) target = $region72
        $region71: #{tpu_custom_call.1} parent=35 // pred_region
          %p551 = scmp.lt.s32.totalorder %s24, 1
          %s552 = scalar_select %p551, %s24, 1
          %s553 = smul.addr %s552, 4
          %s554 = smul.addr %s553, 8
          %s555 = scalar_lea.vmem %s10, %s554
        $region72: #{tpu_custom_call.1} parent=35 // pred_fallthru
          _
        // Predicated region
        $region73: #{tpu_custom_call.1} parent=35 // pred_check
          %p556 = pneg %p320
        $region74: #{tpu_custom_call.1} parent=35 // pred_check_branch
          %558 = sbr.rel (%p556) target = $region76
        $region75: #{tpu_custom_call.1} parent=35 // pred_region
          %p559 = scmp.lt.s32.totalorder %s24, 1
          %s560 = scalar_select %p559, %s24, 1
          %s561 = scalar_lea.vmem %s11, %s560
        $region76: #{tpu_custom_call.1} parent=35 // pred_fallthru
          _
        // Predicated region
        $region77: #{tpu_custom_call.1} parent=35 // pred_check
          %p562 = pneg %p346
        $region78: #{tpu_custom_call.1} parent=35 // pred_check_branch
          %564 = sbr.rel (%p562) target = $region80
        $region79: #{tpu_custom_call.1} parent=35 // pred_region
          %p565 = scmp.lt.s32.totalorder %s24, 1
          %s566 = scalar_select %p565, %s24, 1
          %s567 = smul.addr %s566, 16
          %s568 = smul.addr %s567, 8
          %s569 = scalar_lea.vmem %s12, %s568
        $region80: #{tpu_custom_call.1} parent=35 // pred_fallthru
          _
        // Predicated region
        $region81: #{tpu_custom_call.1} parent=35 // pred_check
          %p570 = pneg %p372
        $region82: #{tpu_custom_call.1} parent=35 // pred_check_branch
          %572 = sbr.rel (%p570) target = $region84
        $region83: #{tpu_custom_call.1} parent=35 // pred_region
          %p573 = scmp.lt.s32.totalorder %s24, 1
          %s574 = scalar_select %p573, %s24, 1
          %s575 = scalar_lea.vmem %s13, %s574
        $region84: #{tpu_custom_call.1} parent=35 // pred_fallthru
          _
      $region36: #{tpu_custom_call.1} parent=5 // pred_fallthru
        _
      %p576 = scmp.le.s32.totalorder 1, %s24
      %p577 = scmp.lt.s32.totalorder %s24, 3
      %p578 = pnand %p576, %p577
      %p579 = pneg %p578
      // Predicated region
      $region85: #{tpu_custom_call.1} parent=5 // pred_check
        _
      $region86: #{tpu_custom_call.1} parent=5 // pred_check_branch
        %581 = sbr.rel (%p578) target = $region88
      $region87: #{tpu_custom_call.1} parent=5 // pred_region
        %s582 = ssub.s32 %s24, 1
        %p583 = pneg %p45
        %p584 = pneg %p42
        %p585 = pneg %p66
        %p586 = pneg %p63
        %p587 = scmp.lt.s32.totalorder %s29, 1
        %s588 = scalar_select %p587, %s29, 1
        %s589 = scalar_lea.vmem %s2, %s588
        %p590 = pneg %p92
        %p591 = pneg %p89
        %p592 = scmp.lt.s32.totalorder %s29, 1
        %s593 = scalar_select %p592, %s29, 1
        %s594 = scalar_lea.vmem %s3, %s593
        %p595 = pneg %p118
        %p596 = pneg %p115
        %p597 = scmp.lt.s32.totalorder %s29, 1
        %s598 = scalar_select %p597, %s29, 1
        %s599 = smul.addr %s598, 4
        %s600 = smul.addr %s599, 8
        %s601 = scalar_lea.vmem %s4, %s600
        %p602 = pneg %p144
        %p603 = pneg %p141
        %p604 = scmp.lt.s32.totalorder %s29, 1
        %s605 = scalar_select %p604, %s29, 1
        %s606 = scalar_lea.vmem %s5, %s605
        %p607 = pneg %p170
        %p608 = pneg %p167
        %p609 = scmp.lt.s32.totalorder %s29, 1
        %s610 = scalar_select %p609, %s29, 1
        %s611 = smul.addr %s610, 4
        %s612 = smul.addr %s611, 8
        %s613 = scalar_lea.vmem %s6, %s612
        %p614 = pneg %p196
        %p615 = pneg %p193
        %p616 = scmp.lt.s32.totalorder %s29, 1
        %s617 = scalar_select %p616, %s29, 1
        %s618 = scalar_lea.vmem %s7, %s617
        %p619 = pneg %p222
        %p620 = pneg %p219
        %p621 = scmp.lt.s32.totalorder %s29, 1
        %s622 = scalar_select %p621, %s29, 1
        %s623 = scalar_lea.vmem %s8, %s622
        %p624 = pneg %p248
        %p625 = pneg %p245
        %p626 = scmp.lt.s32.totalorder %s29, 1
        %s627 = scalar_select %p626, %s29, 1
        %s628 = scalar_lea.vmem %s9, %s627
        %p629 = pneg %p274
        %p630 = pneg %p271
        %p631 = scmp.lt.s32.totalorder %s29, 1
        %s632 = scalar_select %p631, %s29, 1
        %s633 = smul.addr %s632, 4
        %s634 = smul.addr %s633, 8
        %s635 = scalar_lea.vmem %s10, %s634
        %p636 = pneg %p300
        %p637 = pneg %p297
        %p638 = scmp.lt.s32.totalorder %s29, 1
        %s639 = scalar_select %p638, %s29, 1
        %s640 = scalar_lea.vmem %s11, %s639
        %p641 = pneg %p326
        %p642 = pneg %p323
        %p643 = scmp.lt.s32.totalorder %s29, 1
        %s644 = scalar_select %p643, %s29, 1
        %s645 = smul.addr %s644, 16
        %s646 = smul.addr %s645, 8
        %s647 = scalar_lea.vmem %s12, %s646
        %p648 = pneg %p352
        %p649 = pneg %p349
        %p650 = scmp.lt.s32.totalorder %s29, 1
        %s651 = scalar_select %p650, %s29, 1
        %s652 = scalar_lea.vmem %s13, %s651
        %p653 = pneg %p378
        %p654 = pneg %p375
        %p655 = pneg %p399
        %p656 = pneg %p396
        %p657 = pneg %p420
        %p658 = pneg %p417
        %p659 = pneg %p441
        %p660 = pneg %p438
        %p661 = pneg %p462
        %p662 = pneg %p459
        %p663 = scmp.lt.s32.totalorder %s29, 1
        %s664 = scalar_select %p663, %s29, 1
        %s665 = scalar_lea.vmem %s2, %s664
        %p666 = scmp.lt.s32.totalorder %s29, 1
        %s667 = scalar_select %p666, %s29, 1
        %s668 = scalar_lea.vmem %s3, %s667
        %p669 = scmp.lt.s32.totalorder %s29, 1
        %s670 = scalar_select %p669, %s29, 1
        %s671 = smul.addr %s670, 4
        %s672 = smul.addr %s671, 8
        %s673 = scalar_lea.vmem %s4, %s672
        %p674 = scmp.lt.s32.totalorder %s29, 1
        %s675 = scalar_select %p674, %s29, 1
        %s676 = scalar_lea.vmem %s5, %s675
        %p677 = scmp.lt.s32.totalorder %s29, 1
        %s678 = scalar_select %p677, %s29, 1
        %s679 = smul.addr %s678, 4
        %s680 = smul.addr %s679, 8
        %s681 = scalar_lea.vmem %s6, %s680
        %p682 = scmp.lt.s32.totalorder %s29, 1
        %s683 = scalar_select %p682, %s29, 1
        %s684 = scalar_lea.vmem %s7, %s683
        %p685 = scmp.lt.s32.totalorder %s29, 1
        %s686 = scalar_select %p685, %s29, 1
        %s687 = scalar_lea.vmem %s8, %s686
        %p688 = scmp.lt.s32.totalorder %s29, 1
        %s689 = scalar_select %p688, %s29, 1
        %s690 = scalar_lea.vmem %s9, %s689
        %p691 = scmp.lt.s32.totalorder %s29, 1
        %s692 = scalar_select %p691, %s29, 1
        %s693 = smul.addr %s692, 4
        %s694 = smul.addr %s693, 8
        %s695 = scalar_lea.vmem %s10, %s694
        %p696 = scmp.lt.s32.totalorder %s29, 1
        %s697 = scalar_select %p696, %s29, 1
        %s698 = scalar_lea.vmem %s11, %s697
        %p699 = scmp.lt.s32.totalorder %s29, 1
        %s700 = scalar_select %p699, %s29, 1
        %s701 = smul.addr %s700, 16
        %s702 = smul.addr %s701, 8
        %s703 = scalar_lea.vmem %s12, %s702
        %p704 = scmp.lt.s32.totalorder %s29, 1
        %s705 = scalar_select %p704, %s29, 1
        %s706 = scalar_lea.vmem %s13, %s705
        %p707 = scmp.eq.s32.totalorder %s29, 0
        // Predicated region
        $region89: #{tpu_custom_call.1} parent=87 // pred_check
          %p708 = pneg %p707
        $region90: #{tpu_custom_call.1} parent=87 // pred_check_branch
          %710 = sbr.rel (%p708) target = $region92
        $region91: #{tpu_custom_call.1} parent=87 // pred_region
          %v711 = vld [vmem:[%s0] sm:$0xff]
          %v712 = vld [vmem:[%s0 + $0x8] sm:$0xff]
          %vm713 = vcmask 261120
          %714 = vst.msk [vmem:[#allocation2] sm:$0xff] %vm713, %v711
          %715 = vst.msk [vmem:[#allocation2 + $0x8] sm:$0xff] %vm713, %v712
        $region92: #{tpu_custom_call.1} parent=87 // pred_fallthru
          _
        %v716 = vld [vmem:[%s665] sm:$0x1]
        %v717 = vld [vmem:[%s668] sm:$0x1]
        %v718 = vld [vmem:[%s687] sm:$0x1]
        %v719 = vld [vmem:[%s690] sm:$0x1]
        %v720 = vld [vmem:[%s673] sm:$0xff]
        %v721 = vld [vmem:[%s673 + $0x8] sm:$0xff]
        %v722 = vld [vmem:[%s673 + $0x10] sm:$0xff]
        %v723 = vld [vmem:[%s673 + $0x18] sm:$0xff]
        %v724 = vld [vmem:[%s676] sm:$0x1]
        %v725 = vld [vmem:[%s681] sm:$0xff]
        %v726 = vld [vmem:[%s681 + $0x8] sm:$0xff]
        %v727 = vld [vmem:[%s681 + $0x10] sm:$0xff]
        %v728 = vld [vmem:[%s681 + $0x18] sm:$0xff]
        %v729 = vld [vmem:[%s684] sm:$0x1]
        %v730 = vld [vmem:[%s695] sm:$0xff]
        %v731 = vld [vmem:[%s695 + $0x8] sm:$0xff]
        %v732 = vld [vmem:[%s695 + $0x10] sm:$0xff]
        %v733 = vld [vmem:[%s695 + $0x18] sm:$0xff]
        %v734 = vld [vmem:[%s698] sm:$0x1]
        %v735 = vld [vmem:[%s703] sm:$0xff]
        %v736 = vld [vmem:[%s703 + $0x8] sm:$0xff]
        %v737 = vld [vmem:[%s703 + $0x10] sm:$0xff]
        %v738 = vld [vmem:[%s703 + $0x18] sm:$0xff]
        %v739 = vld [vmem:[%s703 + $0x20] sm:$0xff]
        %v740 = vld [vmem:[%s703 + $0x28] sm:$0xff]
        %v741 = vld [vmem:[%s703 + $0x30] sm:$0xff]
        %v742 = vld [vmem:[%s703 + $0x38] sm:$0xff]
        %v743 = vld [vmem:[%s703 + $0x40] sm:$0xff]
        %v744 = vld [vmem:[%s703 + $0x48] sm:$0xff]
        %v745 = vld [vmem:[%s703 + $0x50] sm:$0xff]
        %v746 = vld [vmem:[%s703 + $0x58] sm:$0xff]
        %v747 = vld [vmem:[%s703 + $0x60] sm:$0xff]
        %v748 = vld [vmem:[%s703 + $0x68] sm:$0xff]
        %v749 = vld [vmem:[%s703 + $0x70] sm:$0xff]
        %v750 = vld [vmem:[%s703 + $0x78] sm:$0xff]
        %v751 = vld [vmem:[%s706] sm:$0x1]
        %v752 = vld [vmem:[%s1] sm:$0xff]
        %v753 = vld [vmem:[%s1 + $0x8] sm:$0xff]
        %v754 = vld [vmem:[#allocation2] sm:$0xff]
        %v755 = vld [vmem:[#allocation2 + $0x8] sm:$0xff]
        %vm756 = vcmask 261120
        %v757 = vsel %vm756, %v754, 0.0
        %758 = vadd.xlane.f32.xlu0 %v757
        %v759 = vpop.xlane.xlu0 %758
        %v760 = vsel %vm756, %v755, 0.0
        %761 = vadd.xlane.f32.xlu0 %v760
        %v762 = vpop.xlane.xlu0 %761
        %v763 = vrcp.pop 32.0
        %v764 = vmul.f32 %v759, %v763
        %v765 = vmul.f32 %v762, %v763
        %v766 = vsub.f32 %v754, %v764
        %v767 = vsub.f32 %v755, %v765
        %v768 = vmul.f32 %v766, %v766
        %v769 = vmul.f32 %v767, %v767
        %v770 = vsel %vm756, %v768, 0.0
        %771 = vadd.xlane.f32.xlu0 %v770
        %v772 = vpop.xlane.xlu0 %771
        %v773 = vsel %vm756, %v769, 0.0
        %774 = vadd.xlane.f32.xlu0 %v773
        %v775 = vpop.xlane.xlu0 %774
        %v776 = vmul.f32 %v772, %v763
        %v777 = vmul.f32 %v775, %v763
        %v778 = vadd.f32 %v776, 1e-05
        %v779 = vadd.f32 %v777, 1e-05
        %v780 = vrsqrt.pop %v778
        %v781 = vrsqrt.pop %v779
        %v782 = vmul.f32 %v766, %v780
        %v783 = vmul.f32 %v767, %v781
        %v785 = vlaneseq
        %v786 = vshrl.u32 %v785, 7
        %v787 = vsub.s32 0, %v786
        %v788 = vrot.slane %v716, %v787
        %v790 = vmul.f32 %v782, %v788
        %v791 = vmul.f32 %v783, %v788
        %v793 = vlaneseq
        %v794 = vshrl.u32 %v793, 7
        %v795 = vsub.s32 0, %v794
        %v796 = vrot.slane %v717, %v795
        %v798 = vadd.f32 %v790, %v796
        %v799 = vadd.f32 %v791, %v796
        %v801 = vlaneseq
        %v802 = vshrl.u32 %v801, 7
        %v803 = vsub.s32 0, %v802
        %v804 = vrot.slane %v724, %v803
        %v807 = vsel %vm756, %v798, 0
        %v810 = vsel %vm756, %v799, 0
        %812 = vmatprep.subr.mxu0 0.0
        %813 = vmatpush1.msra.mxu0 %v720
        %814 = vmatprep.subr.mxu0 0.0
        %815 = vmatpush1.msra.mxu0 %v721
        %816 = vmatprep.subr.mxu0 0.0
        %817 = vmatpush1.msra.mxu0 %v722
        %818 = vmatprep.subr.mxu0 0.0
        %819 = vmatpush1.msra.mxu0 %v723
        %820 = vmatprep.subr.mxu0 0.0
        %821 = vmatpush1.msra.mxu0 0.0
        %822 = vmatprep.subr.mxu0 0.0
        %823 = vmatpush1.msra.mxu0 0.0
        %824 = vmatprep.subr.mxu0 0.0
        %825 = vmatpush1.msra.mxu0 0.0
        %826 = vmatprep.subr.mxu0 0.0
        %827 = vmatpush1.msra.mxu0 0.0
        %828 = vmatprep.subr.mxu0 0.0
        %829 = vmatpush1.msra.mxu0 0.0
        %830 = vmatprep.subr.mxu0 0.0
        %831 = vmatpush1.msra.mxu0 0.0
        %832 = vmatprep.subr.mxu0 0.0
        %833 = vmatpush1.msra.mxu0 0.0
        %834 = vmatprep.subr.mxu0 0.0
        %835 = vmatpush1.msra.mxu0 0.0
        %836 = vmatprep.subr.mxu0 0.0
        %837 = vmatpush1.msra.mxu0 0.0
        %838 = vmatprep.subr.mxu0 0.0
        %839 = vmatpush1.msra.mxu0 0.0
        %840 = vmatprep.subr.mxu0 0.0
        %841 = vmatpush1.msra.mxu0 0.0
        %842 = vmatprep.subr.mxu0 0.0
        %843 = vmatpush1.msra.mxu0 0.0
        %844 = vmatprep.subr.mxu0 0.0
        %845 = vmatpush1.msra.mxu0 0.0
        %846 = vmatprep.subr.mxu0 0.0
        %847 = vmatpush1.msra.mxu0 0.0
        %848 = vmatprep.subr.mxu0 0.0
        %849 = vmatpush1.msra.mxu0 0.0
        %850 = vmatprep.subr.mxu0 0.0
        %851 = vmatpush1.msra.mxu0 0.0
        %852 = vmatprep.subr.mxu0 0.0
        %853 = vmatpush1.msra.mxu0 0.0
        %854 = vmatprep.subr.mxu0 0.0
        %855 = vmatpush1.msra.mxu0 0.0
        %856 = vmatprep.subr.mxu0 0.0
        %857 = vmatpush1.msra.mxu0 0.0
        %858 = vmatprep.subr.mxu0 0.0
        %859 = vmatpush1.msra.mxu0 0.0
        %860 = vmatprep.subr.mxu0 0.0
        %861 = vmatpush1.msra.mxu0 0.0
        %862 = vmatprep.subr.mxu0 0.0
        %863 = vmatpush1.msra.mxu0 0.0
        %864 = vmatprep.subr.mxu0 0.0
        %865 = vmatpush1.msra.mxu0 0.0
        %866 = vmatprep.subr.mxu0 0.0
        %867 = vmatpush1.msra.mxu0 0.0
        %868 = vmatprep.subr.mxu0 0.0
        %869 = vmatpush1.msra.mxu0 0.0
        %870 = vmatprep.subr.mxu0 0.0
        %871 = vmatpush1.msra.mxu0 0.0
        %872 = vmatprep.subr.mxu0 0.0
        %873 = vmatpush1.msra.mxu0 0.0
        %874 = vmatprep.subr.mxu0 0.0
        %875 = vmatpush1.msra.mxu0 0.0
        %876 = vmatprep.mubr.f32.mxu0 0.0
        %877 = vmatmul.mubr.f32.gmra.mrb[0].mxu0 %v807
        %v878 = vpop.f32.mrb[0].mxu0
        %v879 = vadd.f32 %v804, %v878
        %v880 = vpop.f32.mrb[0].mxu0
        %881 = vmatprep.mubr.f32.mxu0 0.0
        %882 = vmatmul.mubr.f32.gmra.mrb[0].mxu0 %v810
        %v883 = vpop.f32.mrb[0].mxu0
        %v884 = vadd.f32 %v804, %v883
        %v885 = vpop.f32.mrb[0].mxu0
        %886 = vdwg.mxu0
        %889 = vrot.lane.b32.xlu0 %v879, 96
        %v890 = vpop.permute.xlu0 %889
        %891 = vrot.lane.b32.xlu0 %v884, 96
        %v892 = vpop.permute.xlu0 %891
        %vm893 = vcmask 64512
        %v894 = vsel %vm893, %v879, 0
        %v896 = vsel %vm893, %v884, 0
        %v898 = vsel %vm893, %v890, 0
        %v900 = vsel %vm893, %v892, 0
        %902 = vmatprep.subr.mxu0 0.0
        %903 = vmatpush1.xpose.msra.mxu0 %v898
        %904 = vmatprep.subr.mxu0 0.0
        %905 = vmatpush1.xpose.msra.mxu0 %v900
        %906 = vmatprep.subr.mxu0 0.0
        %907 = vmatpush1.xpose.msra.mxu0 0.0
        %908 = vmatprep.subr.mxu0 0.0
        %909 = vmatpush1.xpose.msra.mxu0 0.0
        %910 = vmatprep.subr.mxu0 0.0
        %911 = vmatpush1.xpose.msra.mxu0 0.0
        %912 = vmatprep.subr.mxu0 0.0
        %913 = vmatpush1.xpose.msra.mxu0 0.0
        %914 = vmatprep.subr.mxu0 0.0
        %915 = vmatpush1.xpose.msra.mxu0 0.0
        %916 = vmatprep.subr.mxu0 0.0
        %917 = vmatpush1.xpose.msra.mxu0 0.0
        %918 = vmatprep.subr.mxu0 0.0
        %919 = vmatpush1.xpose.msra.mxu0 0.0
        %920 = vmatprep.subr.mxu0 0.0
        %921 = vmatpush1.xpose.msra.mxu0 0.0
        %922 = vmatprep.subr.mxu0 0.0
        %923 = vmatpush1.xpose.msra.mxu0 0.0
        %924 = vmatprep.subr.mxu0 0.0
        %925 = vmatpush1.xpose.msra.mxu0 0.0
        %926 = vmatprep.subr.mxu0 0.0
        %927 = vmatpush1.xpose.msra.mxu0 0.0
        %928 = vmatprep.subr.mxu0 0.0
        %929 = vmatpush1.xpose.msra.mxu0 0.0
        %930 = vmatprep.subr.mxu0 0.0
        %931 = vmatpush1.xpose.msra.mxu0 0.0
        %932 = vmatprep.subr.mxu0 0.0
        %933 = vmatpush1.xpose.msra.mxu0 0.0
        %934 = vmatprep.subr.mxu0 0.0
        %935 = vmatpush1.xpose.msra.mxu0 0.0
        %936 = vmatprep.subr.mxu0 0.0
        %937 = vmatpush1.xpose.msra.mxu0 0.0
        %938 = vmatprep.subr.mxu0 0.0
        %939 = vmatpush1.xpose.msra.mxu0 0.0
        %940 = vmatprep.subr.mxu0 0.0
        %941 = vmatpush1.xpose.msra.mxu0 0.0
        %942 = vmatprep.subr.mxu0 0.0
        %943 = vmatpush1.xpose.msra.mxu0 0.0
        %944 = vmatprep.subr.mxu0 0.0
        %945 = vmatpush1.xpose.msra.mxu0 0.0
        %946 = vmatprep.subr.mxu0 0.0
        %947 = vmatpush1.xpose.msra.mxu0 0.0
        %948 = vmatprep.subr.mxu0 0.0
        %949 = vmatpush1.xpose.msra.mxu0 0.0
        %950 = vmatprep.subr.mxu0 0.0
        %951 = vmatpush1.xpose.msra.mxu0 0.0
        %952 = vmatprep.subr.mxu0 0.0
        %953 = vmatpush1.xpose.msra.mxu0 0.0
        %954 = vmatprep.subr.mxu0 0.0
        %955 = vmatpush1.xpose.msra.mxu0 0.0
        %956 = vmatprep.subr.mxu0 0.0
        %957 = vmatpush1.xpose.msra.mxu0 0.0
        %958 = vmatprep.subr.mxu0 0.0
        %959 = vmatpush1.xpose.msra.mxu0 0.0
        %960 = vmatprep.subr.mxu0 0.0
        %961 = vmatpush1.xpose.msra.mxu0 0.0
        %962 = vmatprep.subr.mxu0 0.0
        %963 = vmatpush1.xpose.msra.mxu0 0.0
        %964 = vmatprep.subr.mxu0 0.0
        %965 = vmatpush1.xpose.msra.mxu0 0.0
        %966 = vmatprep.mubr.f32.mxu0 0.0
        %967 = vmatmul.mubr.f32.gmra.mrb[0].mxu0 %v894
        %v968 = vpop.f32.mrb[0].mxu0
        %v969 = vadd.f32 %v752, %v968
        %v970 = vpop.f32.mrb[0].mxu0
        %971 = vmatprep.mubr.f32.mxu0 0.0
        %972 = vmatmul.mubr.f32.gmra.mrb[0].mxu0 %v896
        %v973 = vpop.f32.mrb[0].mxu0
        %v974 = vadd.f32 %v753, %v973
        %v975 = vpop.f32.mrb[0].mxu0
        %976 = vdwg.mxu0
        %vm977 = vcmask 130048
        %v978 = vsel %vm977, %v969, -inf
        %979 = vmax.xlane.f32.xlu0 %v978
        %v980 = vpop.xlane.xlu0 %979
        %v981 = vsel %vm977, %v974, -inf
        %982 = vmax.xlane.f32.xlu0 %v981
        %v983 = vpop.xlane.xlu0 %982
        %v984 = vsub.f32 %v969, %v980
        %v985 = vsub.f32 %v974, %v983
        %v986 = vmul.f32 %v984, 1.442695
        %v987 = vpow.pop %v986
        %v988 = vmul.f32 %v985, 1.442695
        %v989 = vpow.pop %v988
        %v990 = vsel %vm977, %v987, 0.0
        %991 = vadd.xlane.f32.xlu0 %v990
        %v992 = vpop.xlane.xlu0 %991
        %v993 = vsel %vm977, %v989, 0.0
        %994 = vadd.xlane.f32.xlu0 %v993
        %v995 = vpop.xlane.xlu0 %994
        %v996 = vrcp.pop %v992
        %v997 = vrcp.pop %v995
        %v998 = vmul.f32 %v987, %v996
        %v999 = vmul.f32 %v989, %v997
        %1000 = vrot.lane.b32.xlu0 %v879, 64
        %v1001 = vpop.permute.xlu0 %1000
        %1002 = vrot.lane.b32.xlu0 %v884, 64
        %v1003 = vpop.permute.xlu0 %1002
        %v1007 = vsel %vm977, %v998, 0
        %v1010 = vsel %vm977, %v999, 0
        %1012 = vmatprep.subr.mxu0 0.0
        %1013 = vmatpush1.msra.mxu0 %v1001
        %1014 = vmatprep.subr.mxu0 0.0
        %1015 = vmatpush1.msra.mxu0 %v1003
        %1016 = vmatprep.subr.mxu0 0.0
        %1017 = vmatpush1.msra.mxu0 0.0
        %1018 = vmatprep.subr.mxu0 0.0
        %1019 = vmatpush1.msra.mxu0 0.0
        %1020 = vmatprep.subr.mxu0 0.0
        %1021 = vmatpush1.msra.mxu0 0.0
        %1022 = vmatprep.subr.mxu0 0.0
        %1023 = vmatpush1.msra.mxu0 0.0
        %1024 = vmatprep.subr.mxu0 0.0
        %1025 = vmatpush1.msra.mxu0 0.0
        %1026 = vmatprep.subr.mxu0 0.0
        %1027 = vmatpush1.msra.mxu0 0.0
        %1028 = vmatprep.subr.mxu0 0.0
        %1029 = vmatpush1.msra.mxu0 0.0
        %1030 = vmatprep.subr.mxu0 0.0
        %1031 = vmatpush1.msra.mxu0 0.0
        %1032 = vmatprep.subr.mxu0 0.0
        %1033 = vmatpush1.msra.mxu0 0.0
        %1034 = vmatprep.subr.mxu0 0.0
        %1035 = vmatpush1.msra.mxu0 0.0
        %1036 = vmatprep.subr.mxu0 0.0
        %1037 = vmatpush1.msra.mxu0 0.0
        %1038 = vmatprep.subr.mxu0 0.0
        %1039 = vmatpush1.msra.mxu0 0.0
        %1040 = vmatprep.subr.mxu0 0.0
        %1041 = vmatpush1.msra.mxu0 0.0
        %1042 = vmatprep.subr.mxu0 0.0
        %1043 = vmatpush1.msra.mxu0 0.0
        %1044 = vmatprep.subr.mxu0 0.0
        %1045 = vmatpush1.msra.mxu0 0.0
        %1046 = vmatprep.subr.mxu0 0.0
        %1047 = vmatpush1.msra.mxu0 0.0
        %1048 = vmatprep.subr.mxu0 0.0
        %1049 = vmatpush1.msra.mxu0 0.0
        %1050 = vmatprep.subr.mxu0 0.0
        %1051 = vmatpush1.msra.mxu0 0.0
        %1052 = vmatprep.subr.mxu0 0.0
        %1053 = vmatpush1.msra.mxu0 0.0
        %1054 = vmatprep.subr.mxu0 0.0
        %1055 = vmatpush1.msra.mxu0 0.0
        %1056 = vmatprep.subr.mxu0 0.0
        %1057 = vmatpush1.msra.mxu0 0.0
        %1058 = vmatprep.subr.mxu0 0.0
        %1059 = vmatpush1.msra.mxu0 0.0
        %1060 = vmatprep.subr.mxu0 0.0
        %1061 = vmatpush1.msra.mxu0 0.0
        %1062 = vmatprep.subr.mxu0 0.0
        %1063 = vmatpush1.msra.mxu0 0.0
        %1064 = vmatprep.subr.mxu0 0.0
        %1065 = vmatpush1.msra.mxu0 0.0
        %1066 = vmatprep.subr.mxu0 0.0
        %1067 = vmatpush1.msra.mxu0 0.0
        %1068 = vmatprep.subr.mxu0 0.0
        %1069 = vmatpush1.msra.mxu0 0.0
        %1070 = vmatprep.subr.mxu0 0.0
        %1071 = vmatpush1.msra.mxu0 0.0
        %1072 = vmatprep.subr.mxu0 0.0
        %1073 = vmatpush1.msra.mxu0 0.0
        %1074 = vmatprep.subr.mxu0 0.0
        %1075 = vmatpush1.msra.mxu0 0.0
        %1076 = vmatprep.mubr.f32.mxu0 0.0
        %1077 = vmatmul.mubr.f32.gmra.mrb[0].mxu0 %v1007
        %v1078 = vpop.f32.mrb[0].mxu0
        %v1079 = vadd.f32 0.0, %v1078
        %v1080 = vpop.f32.mrb[0].mxu0
        %1081 = vmatprep.mubr.f32.mxu0 0.0
        %1082 = vmatmul.mubr.f32.gmra.mrb[0].mxu0 %v1010
        %v1083 = vpop.f32.mrb[0].mxu0
        %v1084 = vadd.f32 0.0, %v1083
        %v1085 = vpop.f32.mrb[0].mxu0
        %1086 = vdwg.mxu0
        %1087 = vrot.lane.b32.xlu0 %v879, 120
        %v1088 = vpop.permute.xlu0 %1087
        %1089 = vrot.lane.b32.xlu0 %v884, 120
        %v1090 = vpop.permute.xlu0 %1089
        %1091 = vrot.lane.b32.xlu0 %v879, 88
        %v1092 = vpop.permute.xlu0 %1091
        %1093 = vrot.lane.b32.xlu0 %v884, 88
        %v1094 = vpop.permute.xlu0 %1093
        %v1095 = vsel %vm893, %v1088, 0
        %v1097 = vsel %vm893, %v1090, 0
        %v1099 = vsel %vm893, %v1092, 0
        %v1101 = vsel %vm893, %v1094, 0
        %1103 = vmatprep.subr.mxu0 0.0
        %1104 = vmatpush1.xpose.msra.mxu0 %v1099
        %1105 = vmatprep.subr.mxu0 0.0
        %1106 = vmatpush1.xpose.msra.mxu0 %v1101
        %1107 = vmatprep.subr.mxu0 0.0
        %1108 = vmatpush1.xpose.msra.mxu0 0.0
        %1109 = vmatprep.subr.mxu0 0.0
        %1110 = vmatpush1.xpose.msra.mxu0 0.0
        %1111 = vmatprep.subr.mxu0 0.0
        %1112 = vmatpush1.xpose.msra.mxu0 0.0
        %1113 = vmatprep.subr.mxu0 0.0
        %1114 = vmatpush1.xpose.msra.mxu0 0.0
        %1115 = vmatprep.subr.mxu0 0.0
        %1116 = vmatpush1.xpose.msra.mxu0 0.0
        %1117 = vmatprep.subr.mxu0 0.0
        %1118 = vmatpush1.xpose.msra.mxu0 0.0
        %1119 = vmatprep.subr.mxu0 0.0
        %1120 = vmatpush1.xpose.msra.mxu0 0.0
        %1121 = vmatprep.subr.mxu0 0.0
        %1122 = vmatpush1.xpose.msra.mxu0 0.0
        %1123 = vmatprep.subr.mxu0 0.0
        %1124 = vmatpush1.xpose.msra.mxu0 0.0
        %1125 = vmatprep.subr.mxu0 0.0
        %1126 = vmatpush1.xpose.msra.mxu0 0.0
        %1127 = vmatprep.subr.mxu0 0.0
        %1128 = vmatpush1.xpose.msra.mxu0 0.0
        %1129 = vmatprep.subr.mxu0 0.0
        %1130 = vmatpush1.xpose.msra.mxu0 0.0
        %1131 = vmatprep.subr.mxu0 0.0
        %1132 = vmatpush1.xpose.msra.mxu0 0.0
        %1133 = vmatprep.subr.mxu0 0.0
        %1134 = vmatpush1.xpose.msra.mxu0 0.0
        %1135 = vmatprep.subr.mxu0 0.0
        %1136 = vmatpush1.xpose.msra.mxu0 0.0
        %1137 = vmatprep.subr.mxu0 0.0
        %1138 = vmatpush1.xpose.msra.mxu0 0.0
        %1139 = vmatprep.subr.mxu0 0.0
        %1140 = vmatpush1.xpose.msra.mxu0 0.0
        %1141 = vmatprep.subr.mxu0 0.0
        %1142 = vmatpush1.xpose.msra.mxu0 0.0
        %1143 = vmatprep.subr.mxu0 0.0
        %1144 = vmatpush1.xpose.msra.mxu0 0.0
        %1145 = vmatprep.subr.mxu0 0.0
        %1146 = vmatpush1.xpose.msra.mxu0 0.0
        %1147 = vmatprep.subr.mxu0 0.0
        %1148 = vmatpush1.xpose.msra.mxu0 0.0
        %1149 = vmatprep.subr.mxu0 0.0
        %1150 = vmatpush1.xpose.msra.mxu0 0.0
        %1151 = vmatprep.subr.mxu0 0.0
        %1152 = vmatpush1.xpose.msra.mxu0 0.0
        %1153 = vmatprep.subr.mxu0 0.0
        %1154 = vmatpush1.xpose.msra.mxu0 0.0
        %1155 = vmatprep.subr.mxu0 0.0
        %1156 = vmatpush1.xpose.msra.mxu0 0.0
        %1157 = vmatprep.subr.mxu0 0.0
        %1158 = vmatpush1.xpose.msra.mxu0 0.0
        %1159 = vmatprep.subr.mxu0 0.0
        %1160 = vmatpush1.xpose.msra.mxu0 0.0
        %1161 = vmatprep.subr.mxu0 0.0
        %1162 = vmatpush1.xpose.msra.mxu0 0.0
        %1163 = vmatprep.subr.mxu0 0.0
        %1164 = vmatpush1.xpose.msra.mxu0 0.0
        %1165 = vmatprep.subr.mxu0 0.0
        %1166 = vmatpush1.xpose.msra.mxu0 0.0
        %1167 = vmatprep.mubr.f32.mxu0 0.0
        %1168 = vmatmul.mubr.f32.gmra.mrb[0].mxu0 %v1095
        %v1169 = vpop.f32.mrb[0].mxu0
        %v1170 = vadd.f32 %v752, %v1169
        %v1171 = vpop.f32.mrb[0].mxu0
        %1172 = vmatprep.mubr.f32.mxu0 0.0
        %1173 = vmatmul.mubr.f32.gmra.mrb[0].mxu0 %v1097
        %v1174 = vpop.f32.mrb[0].mxu0
        %v1175 = vadd.f32 %v753, %v1174
        %v1176 = vpop.f32.mrb[0].mxu0
        %1177 = vdwg.mxu0
        %v1178 = vsel %vm977, %v1170, -inf
        %1179 = vmax.xlane.f32.xlu0 %v1178
        %v1180 = vpop.xlane.xlu0 %1179
        %v1181 = vsel %vm977, %v1175, -inf
        %1182 = vmax.xlane.f32.xlu0 %v1181
        %v1183 = vpop.xlane.xlu0 %1182
        %v1184 = vsub.f32 %v1170, %v1180
        %v1185 = vsub.f32 %v1175, %v1183
        %v1186 = vmul.f32 %v1184, 1.442695
        %v1187 = vpow.pop %v1186
        %v1188 = vmul.f32 %v1185, 1.442695
        %v1189 = vpow.pop %v1188
        %v1190 = vsel %vm977, %v1187, 0.0
        %1191 = vadd.xlane.f32.xlu0 %v1190
        %v1192 = vpop.xlane.xlu0 %1191
        %v1193 = vsel %vm977, %v1189, 0.0
        %1194 = vadd.xlane.f32.xlu0 %v1193
        %v1195 = vpop.xlane.xlu0 %1194
        %v1196 = vrcp.pop %v1192
        %v1197 = vrcp.pop %v1195
        %v1198 = vmul.f32 %v1187, %v1196
        %v1199 = vmul.f32 %v1189, %v1197
        %1200 = vrot.lane.b32.xlu0 %v879, 56
        %v1201 = vpop.permute.xlu0 %1200
        %1202 = vrot.lane.b32.xlu0 %v884, 56
        %v1203 = vpop.permute.xlu0 %1202
        %v1207 = vsel %vm977, %v1198, 0
        %v1210 = vsel %vm977, %v1199, 0
        %1212 = vmatprep.subr.mxu0 0.0
        %1213 = vmatpush1.msra.mxu0 %v1201
        %1214 = vmatprep.subr.mxu0 0.0
        %1215 = vmatpush1.msra.mxu0 %v1203
        %1216 = vmatprep.subr.mxu0 0.0
        %1217 = vmatpush1.msra.mxu0 0.0
        %1218 = vmatprep.subr.mxu0 0.0
        %1219 = vmatpush1.msra.mxu0 0.0
        %1220 = vmatprep.subr.mxu0 0.0
        %1221 = vmatpush1.msra.mxu0 0.0
        %1222 = vmatprep.subr.mxu0 0.0
        %1223 = vmatpush1.msra.mxu0 0.0
        %1224 = vmatprep.subr.mxu0 0.0
        %1225 = vmatpush1.msra.mxu0 0.0
        %1226 = vmatprep.subr.mxu0 0.0
        %1227 = vmatpush1.msra.mxu0 0.0
        %1228 = vmatprep.subr.mxu0 0.0
        %1229 = vmatpush1.msra.mxu0 0.0
        %1230 = vmatprep.subr.mxu0 0.0
        %1231 = vmatpush1.msra.mxu0 0.0
        %1232 = vmatprep.subr.mxu0 0.0
        %1233 = vmatpush1.msra.mxu0 0.0
        %1234 = vmatprep.subr.mxu0 0.0
        %1235 = vmatpush1.msra.mxu0 0.0
        %1236 = vmatprep.subr.mxu0 0.0
        %1237 = vmatpush1.msra.mxu0 0.0
        %1238 = vmatprep.subr.mxu0 0.0
        %1239 = vmatpush1.msra.mxu0 0.0
        %1240 = vmatprep.subr.mxu0 0.0
        %1241 = vmatpush1.msra.mxu0 0.0
        %1242 = vmatprep.subr.mxu0 0.0
        %1243 = vmatpush1.msra.mxu0 0.0
        %1244 = vmatprep.subr.mxu0 0.0
        %1245 = vmatpush1.msra.mxu0 0.0
        %1246 = vmatprep.subr.mxu0 0.0
        %1247 = vmatpush1.msra.mxu0 0.0
        %1248 = vmatprep.subr.mxu0 0.0
        %1249 = vmatpush1.msra.mxu0 0.0
        %1250 = vmatprep.subr.mxu0 0.0
        %1251 = vmatpush1.msra.mxu0 0.0
        %1252 = vmatprep.subr.mxu0 0.0
        %1253 = vmatpush1.msra.mxu0 0.0
        %1254 = vmatprep.subr.mxu0 0.0
        %1255 = vmatpush1.msra.mxu0 0.0
        %1256 = vmatprep.subr.mxu0 0.0
        %1257 = vmatpush1.msra.mxu0 0.0
        %1258 = vmatprep.subr.mxu0 0.0
        %1259 = vmatpush1.msra.mxu0 0.0
        %1260 = vmatprep.subr.mxu0 0.0
        %1261 = vmatpush1.msra.mxu0 0.0
        %1262 = vmatprep.subr.mxu0 0.0
        %1263 = vmatpush1.msra.mxu0 0.0
        %1264 = vmatprep.subr.mxu0 0.0
        %1265 = vmatpush1.msra.mxu0 0.0
        %1266 = vmatprep.subr.mxu0 0.0
        %1267 = vmatpush1.msra.mxu0 0.0
        %1268 = vmatprep.subr.mxu0 0.0
        %1269 = vmatpush1.msra.mxu0 0.0
        %1270 = vmatprep.subr.mxu0 0.0
        %1271 = vmatpush1.msra.mxu0 0.0
        %1272 = vmatprep.subr.mxu0 0.0
        %1273 = vmatpush1.msra.mxu0 0.0
        %1274 = vmatprep.subr.mxu0 0.0
        %1275 = vmatpush1.msra.mxu0 0.0
        %1276 = vmatprep.mubr.f32.mxu0 0.0
        %1277 = vmatmul.mubr.f32.gmra.mrb[0].mxu0 %v1207
        %v1278 = vpop.f32.mrb[0].mxu0
        %v1279 = vadd.f32 0.0, %v1278
        %v1280 = vpop.f32.mrb[0].mxu0
        %1281 = vmatprep.mubr.f32.mxu0 0.0
        %1282 = vmatmul.mubr.f32.gmra.mrb[0].mxu0 %v1210
        %v1283 = vpop.f32.mrb[0].mxu0
        %v1284 = vadd.f32 0.0, %v1283
        %v1285 = vpop.f32.mrb[0].mxu0
        %1286 = vdwg.mxu0
        %1287 = vrot.lane.b32.xlu0 %v879, 112
        %v1288 = vpop.permute.xlu0 %1287
        %1289 = vrot.lane.b32.xlu0 %v884, 112
        %v1290 = vpop.permute.xlu0 %1289
        %1291 = vrot.lane.b32.xlu0 %v879, 80
        %v1292 = vpop.permute.xlu0 %1291
        %1293 = vrot.lane.b32.xlu0 %v884, 80
        %v1294 = vpop.permute.xlu0 %1293
        %v1295 = vsel %vm893, %v1288, 0
        %v1297 = vsel %vm893, %v1290, 0
        %v1299 = vsel %vm893, %v1292, 0
        %v1301 = vsel %vm893, %v1294, 0
        %1303 = vmatprep.subr.mxu0 0.0
        %1304 = vmatpush1.xpose.msra.mxu0 %v1299
        %1305 = vmatprep.subr.mxu0 0.0
        %1306 = vmatpush1.xpose.msra.mxu0 %v1301
        %1307 = vmatprep.subr.mxu0 0.0
        %1308 = vmatpush1.xpose.msra.mxu0 0.0
        %1309 = vmatprep.subr.mxu0 0.0
        %1310 = vmatpush1.xpose.msra.mxu0 0.0
        %1311 = vmatprep.subr.mxu0 0.0
        %1312 = vmatpush1.xpose.msra.mxu0 0.0
        %1313 = vmatprep.subr.mxu0 0.0
        %1314 = vmatpush1.xpose.msra.mxu0 0.0
        %1315 = vmatprep.subr.mxu0 0.0
        %1316 = vmatpush1.xpose.msra.mxu0 0.0
        %1317 = vmatprep.subr.mxu0 0.0
        %1318 = vmatpush1.xpose.msra.mxu0 0.0
        %1319 = vmatprep.subr.mxu0 0.0
        %1320 = vmatpush1.xpose.msra.mxu0 0.0
        %1321 = vmatprep.subr.mxu0 0.0
        %1322 = vmatpush1.xpose.msra.mxu0 0.0
        %1323 = vmatprep.subr.mxu0 0.0
        %1324 = vmatpush1.xpose.msra.mxu0 0.0
        %1325 = vmatprep.subr.mxu0 0.0
        %1326 = vmatpush1.xpose.msra.mxu0 0.0
        %1327 = vmatprep.subr.mxu0 0.0
        %1328 = vmatpush1.xpose.msra.mxu0 0.0
        %1329 = vmatprep.subr.mxu0 0.0
        %1330 = vmatpush1.xpose.msra.mxu0 0.0
        %1331 = vmatprep.subr.mxu0 0.0
        %1332 = vmatpush1.xpose.msra.mxu0 0.0
        %1333 = vmatprep.subr.mxu0 0.0
        %1334 = vmatpush1.xpose.msra.mxu0 0.0
        %1335 = vmatprep.subr.mxu0 0.0
        %1336 = vmatpush1.xpose.msra.mxu0 0.0
        %1337 = vmatprep.subr.mxu0 0.0
        %1338 = vmatpush1.xpose.msra.mxu0 0.0
        %1339 = vmatprep.subr.mxu0 0.0
        %1340 = vmatpush1.xpose.msra.mxu0 0.0
        %1341 = vmatprep.subr.mxu0 0.0
        %1342 = vmatpush1.xpose.msra.mxu0 0.0
        %1343 = vmatprep.subr.mxu0 0.0
        %1344 = vmatpush1.xpose.msra.mxu0 0.0
        %1345 = vmatprep.subr.mxu0 0.0
        %1346 = vmatpush1.xpose.msra.mxu0 0.0
        %1347 = vmatprep.subr.mxu0 0.0
        %1348 = vmatpush1.xpose.msra.mxu0 0.0
        %1349 = vmatprep.subr.mxu0 0.0
        %1350 = vmatpush1.xpose.msra.mxu0 0.0
        %1351 = vmatprep.subr.mxu0 0.0
        %1352 = vmatpush1.xpose.msra.mxu0 0.0
        %1353 = vmatprep.subr.mxu0 0.0
        %1354 = vmatpush1.xpose.msra.mxu0 0.0
        %1355 = vmatprep.subr.mxu0 0.0
        %1356 = vmatpush1.xpose.msra.mxu0 0.0
        %1357 = vmatprep.subr.mxu0 0.0
        %1358 = vmatpush1.xpose.msra.mxu0 0.0
        %1359 = vmatprep.subr.mxu0 0.0
        %1360 = vmatpush1.xpose.msra.mxu0 0.0
        %1361 = vmatprep.subr.mxu0 0.0
        %1362 = vmatpush1.xpose.msra.mxu0 0.0
        %1363 = vmatprep.subr.mxu0 0.0
        %1364 = vmatpush1.xpose.msra.mxu0 0.0
        %1365 = vmatprep.subr.mxu0 0.0
        %1366 = vmatpush1.xpose.msra.mxu0 0.0
        %1367 = vmatprep.mubr.f32.mxu0 0.0
        %1368 = vmatmul.mubr.f32.gmra.mrb[0].mxu0 %v1295
        %v1369 = vpop.f32.mrb[0].mxu0
        %v1370 = vadd.f32 %v752, %v1369
        %v1371 = vpop.f32.mrb[0].mxu0
        %1372 = vmatprep.mubr.f32.mxu0 0.0
        %1373 = vmatmul.mubr.f32.gmra.mrb[0].mxu0 %v1297
        %v1374 = vpop.f32.mrb[0].mxu0
        %v1375 = vadd.f32 %v753, %v1374
        %v1376 = vpop.f32.mrb[0].mxu0
        %1377 = vdwg.mxu0
        %v1378 = vsel %vm977, %v1370, -inf
        %1379 = vmax.xlane.f32.xlu0 %v1378
        %v1380 = vpop.xlane.xlu0 %1379
        %v1381 = vsel %vm977, %v1375, -inf
        %1382 = vmax.xlane.f32.xlu0 %v1381
        %v1383 = vpop.xlane.xlu0 %1382
        %v1384 = vsub.f32 %v1370, %v1380
        %v1385 = vsub.f32 %v1375, %v1383
        %v1386 = vmul.f32 %v1384, 1.442695
        %v1387 = vpow.pop %v1386
        %v1388 = vmul.f32 %v1385, 1.442695
        %v1389 = vpow.pop %v1388
        %v1390 = vsel %vm977, %v1387, 0.0
        %1391 = vadd.xlane.f32.xlu0 %v1390
        %v1392 = vpop.xlane.xlu0 %1391
        %v1393 = vsel %vm977, %v1389, 0.0
        %1394 = vadd.xlane.f32.xlu0 %v1393
        %v1395 = vpop.xlane.xlu0 %1394
        %v1396 = vrcp.pop %v1392
        %v1397 = vrcp.pop %v1395
        %v1398 = vmul.f32 %v1387, %v1396
        %v1399 = vmul.f32 %v1389, %v1397
        %1400 = vrot.lane.b32.xlu0 %v879, 48
        %v1401 = vpop.permute.xlu0 %1400
        %1402 = vrot.lane.b32.xlu0 %v884, 48
        %v1403 = vpop.permute.xlu0 %1402
        %v1407 = vsel %vm977, %v1398, 0
        %v1410 = vsel %vm977, %v1399, 0
        %1412 = vmatprep.subr.mxu0 0.0
        %1413 = vmatpush1.msra.mxu0 %v1401
        %1414 = vmatprep.subr.mxu0 0.0
        %1415 = vmatpush1.msra.mxu0 %v1403
        %1416 = vmatprep.subr.mxu0 0.0
        %1417 = vmatpush1.msra.mxu0 0.0
        %1418 = vmatprep.subr.mxu0 0.0
        %1419 = vmatpush1.msra.mxu0 0.0
        %1420 = vmatprep.subr.mxu0 0.0
        %1421 = vmatpush1.msra.mxu0 0.0
        %1422 = vmatprep.subr.mxu0 0.0
        %1423 = vmatpush1.msra.mxu0 0.0
        %1424 = vmatprep.subr.mxu0 0.0
        %1425 = vmatpush1.msra.mxu0 0.0
        %1426 = vmatprep.subr.mxu0 0.0
        %1427 = vmatpush1.msra.mxu0 0.0
        %1428 = vmatprep.subr.mxu0 0.0
        %1429 = vmatpush1.msra.mxu0 0.0
        %1430 = vmatprep.subr.mxu0 0.0
        %1431 = vmatpush1.msra.mxu0 0.0
        %1432 = vmatprep.subr.mxu0 0.0
        %1433 = vmatpush1.msra.mxu0 0.0
        %1434 = vmatprep.subr.mxu0 0.0
        %1435 = vmatpush1.msra.mxu0 0.0
        %1436 = vmatprep.subr.mxu0 0.0
        %1437 = vmatpush1.msra.mxu0 0.0
        %1438 = vmatprep.subr.mxu0 0.0
        %1439 = vmatpush1.msra.mxu0 0.0
        %1440 = vmatprep.subr.mxu0 0.0
        %1441 = vmatpush1.msra.mxu0 0.0
        %1442 = vmatprep.subr.mxu0 0.0
        %1443 = vmatpush1.msra.mxu0 0.0
        %1444 = vmatprep.subr.mxu0 0.0
        %1445 = vmatpush1.msra.mxu0 0.0
        %1446 = vmatprep.subr.mxu0 0.0
        %1447 = vmatpush1.msra.mxu0 0.0
        %1448 = vmatprep.subr.mxu0 0.0
        %1449 = vmatpush1.msra.mxu0 0.0
        %1450 = vmatprep.subr.mxu0 0.0
        %1451 = vmatpush1.msra.mxu0 0.0
        %1452 = vmatprep.subr.mxu0 0.0
        %1453 = vmatpush1.msra.mxu0 0.0
        %1454 = vmatprep.subr.mxu0 0.0
        %1455 = vmatpush1.msra.mxu0 0.0
        %1456 = vmatprep.subr.mxu0 0.0
        %1457 = vmatpush1.msra.mxu0 0.0
        %1458 = vmatprep.subr.mxu0 0.0
        %1459 = vmatpush1.msra.mxu0 0.0
        %1460 = vmatprep.subr.mxu0 0.0
        %1461 = vmatpush1.msra.mxu0 0.0
        %1462 = vmatprep.subr.mxu0 0.0
        %1463 = vmatpush1.msra.mxu0 0.0
        %1464 = vmatprep.subr.mxu0 0.0
        %1465 = vmatpush1.msra.mxu0 0.0
        %1466 = vmatprep.subr.mxu0 0.0
        %1467 = vmatpush1.msra.mxu0 0.0
        %1468 = vmatprep.subr.mxu0 0.0
        %1469 = vmatpush1.msra.mxu0 0.0
        %1470 = vmatprep.subr.mxu0 0.0
        %1471 = vmatpush1.msra.mxu0 0.0
        %1472 = vmatprep.subr.mxu0 0.0
        %1473 = vmatpush1.msra.mxu0 0.0
        %1474 = vmatprep.subr.mxu0 0.0
        %1475 = vmatpush1.msra.mxu0 0.0
        %1476 = vmatprep.mubr.f32.mxu0 0.0
        %1477 = vmatmul.mubr.f32.gmra.mrb[0].mxu0 %v1407
        %v1478 = vpop.f32.mrb[0].mxu0
        %v1479 = vadd.f32 0.0, %v1478
        %v1480 = vpop.f32.mrb[0].mxu0
        %1481 = vmatprep.mubr.f32.mxu0 0.0
        %1482 = vmatmul.mubr.f32.gmra.mrb[0].mxu0 %v1410
        %v1483 = vpop.f32.mrb[0].mxu0
        %v1484 = vadd.f32 0.0, %v1483
        %v1485 = vpop.f32.mrb[0].mxu0
        %1486 = vdwg.mxu0
        %1487 = vrot.lane.b32.xlu0 %v879, 104
        %v1488 = vpop.permute.xlu0 %1487
        %1489 = vrot.lane.b32.xlu0 %v884, 104
        %v1490 = vpop.permute.xlu0 %1489
        %1491 = vrot.lane.b32.xlu0 %v879, 72
        %v1492 = vpop.permute.xlu0 %1491
        %1493 = vrot.lane.b32.xlu0 %v884, 72
        %v1494 = vpop.permute.xlu0 %1493
        %v1495 = vsel %vm893, %v1488, 0
        %v1497 = vsel %vm893, %v1490, 0
        %v1499 = vsel %vm893, %v1492, 0
        %v1501 = vsel %vm893, %v1494, 0
        %1503 = vmatprep.subr.mxu0 0.0
        %1504 = vmatpush1.xpose.msra.mxu0 %v1499
        %1505 = vmatprep.subr.mxu0 0.0
        %1506 = vmatpush1.xpose.msra.mxu0 %v1501
        %1507 = vmatprep.subr.mxu0 0.0
        %1508 = vmatpush1.xpose.msra.mxu0 0.0
        %1509 = vmatprep.subr.mxu0 0.0
        %1510 = vmatpush1.xpose.msra.mxu0 0.0
        %1511 = vmatprep.subr.mxu0 0.0
        %1512 = vmatpush1.xpose.msra.mxu0 0.0
        %1513 = vmatprep.subr.mxu0 0.0
        %1514 = vmatpush1.xpose.msra.mxu0 0.0
        %1515 = vmatprep.subr.mxu0 0.0
        %1516 = vmatpush1.xpose.msra.mxu0 0.0
        %1517 = vmatprep.subr.mxu0 0.0
        %1518 = vmatpush1.xpose.msra.mxu0 0.0
        %1519 = vmatprep.subr.mxu0 0.0
        %1520 = vmatpush1.xpose.msra.mxu0 0.0
        %1521 = vmatprep.subr.mxu0 0.0
        %1522 = vmatpush1.xpose.msra.mxu0 0.0
        %1523 = vmatprep.subr.mxu0 0.0
        %1524 = vmatpush1.xpose.msra.mxu0 0.0
        %1525 = vmatprep.subr.mxu0 0.0
        %1526 = vmatpush1.xpose.msra.mxu0 0.0
        %1527 = vmatprep.subr.mxu0 0.0
        %1528 = vmatpush1.xpose.msra.mxu0 0.0
        %1529 = vmatprep.subr.mxu0 0.0
        %1530 = vmatpush1.xpose.msra.mxu0 0.0
        %1531 = vmatprep.subr.mxu0 0.0
        %1532 = vmatpush1.xpose.msra.mxu0 0.0
        %1533 = vmatprep.subr.mxu0 0.0
        %1534 = vmatpush1.xpose.msra.mxu0 0.0
        %1535 = vmatprep.subr.mxu0 0.0
        %1536 = vmatpush1.xpose.msra.mxu0 0.0
        %1537 = vmatprep.subr.mxu0 0.0
        %1538 = vmatpush1.xpose.msra.mxu0 0.0
        %1539 = vmatprep.subr.mxu0 0.0
        %1540 = vmatpush1.xpose.msra.mxu0 0.0
        %1541 = vmatprep.subr.mxu0 0.0
        %1542 = vmatpush1.xpose.msra.mxu0 0.0
        %1543 = vmatprep.subr.mxu0 0.0
        %1544 = vmatpush1.xpose.msra.mxu0 0.0
        %1545 = vmatprep.subr.mxu0 0.0
        %1546 = vmatpush1.xpose.msra.mxu0 0.0
        %1547 = vmatprep.subr.mxu0 0.0
        %1548 = vmatpush1.xpose.msra.mxu0 0.0
        %1549 = vmatprep.subr.mxu0 0.0
        %1550 = vmatpush1.xpose.msra.mxu0 0.0
        %1551 = vmatprep.subr.mxu0 0.0
        %1552 = vmatpush1.xpose.msra.mxu0 0.0
        %1553 = vmatprep.subr.mxu0 0.0
        %1554 = vmatpush1.xpose.msra.mxu0 0.0
        %1555 = vmatprep.subr.mxu0 0.0
        %1556 = vmatpush1.xpose.msra.mxu0 0.0
        %1557 = vmatprep.subr.mxu0 0.0
        %1558 = vmatpush1.xpose.msra.mxu0 0.0
        %1559 = vmatprep.subr.mxu0 0.0
        %1560 = vmatpush1.xpose.msra.mxu0 0.0
        %1561 = vmatprep.subr.mxu0 0.0
        %1562 = vmatpush1.xpose.msra.mxu0 0.0
        %1563 = vmatprep.subr.mxu0 0.0
        %1564 = vmatpush1.xpose.msra.mxu0 0.0
        %1565 = vmatprep.subr.mxu0 0.0
        %1566 = vmatpush1.xpose.msra.mxu0 0.0
        %1567 = vmatprep.mubr.f32.mxu0 0.0
        %1568 = vmatmul.mubr.f32.gmra.mrb[0].mxu0 %v1495
        %v1569 = vpop.f32.mrb[0].mxu0
        %v1570 = vadd.f32 %v752, %v1569
        %v1571 = vpop.f32.mrb[0].mxu0
        %1572 = vmatprep.mubr.f32.mxu0 0.0
        %1573 = vmatmul.mubr.f32.gmra.mrb[0].mxu0 %v1497
        %v1574 = vpop.f32.mrb[0].mxu0
        %v1575 = vadd.f32 %v753, %v1574
        %v1576 = vpop.f32.mrb[0].mxu0
        %1577 = vdwg.mxu0
        %v1578 = vsel %vm977, %v1570, -inf
        %1579 = vmax.xlane.f32.xlu0 %v1578
        %v1580 = vpop.xlane.xlu0 %1579
        %v1581 = vsel %vm977, %v1575, -inf
        %1582 = vmax.xlane.f32.xlu0 %v1581
        %v1583 = vpop.xlane.xlu0 %1582
        %v1584 = vsub.f32 %v1570, %v1580
        %v1585 = vsub.f32 %v1575, %v1583
        %v1586 = vmul.f32 %v1584, 1.442695
        %v1587 = vpow.pop %v1586
        %v1588 = vmul.f32 %v1585, 1.442695
        %v1589 = vpow.pop %v1588
        %v1590 = vsel %vm977, %v1587, 0.0
        %1591 = vadd.xlane.f32.xlu0 %v1590
        %v1592 = vpop.xlane.xlu0 %1591
        %v1593 = vsel %vm977, %v1589, 0.0
        %1594 = vadd.xlane.f32.xlu0 %v1593
        %v1595 = vpop.xlane.xlu0 %1594
        %v1596 = vrcp.pop %v1592
        %v1597 = vrcp.pop %v1595
        %v1598 = vmul.f32 %v1587, %v1596
        %v1599 = vmul.f32 %v1589, %v1597
        %1600 = vrot.lane.b32.xlu0 %v879, 40
        %v1601 = vpop.permute.xlu0 %1600
        %1602 = vrot.lane.b32.xlu0 %v884, 40
        %v1603 = vpop.permute.xlu0 %1602
        %v1607 = vsel %vm977, %v1598, 0
        %v1610 = vsel %vm977, %v1599, 0
        %1612 = vmatprep.subr.mxu0 0.0
        %1613 = vmatpush1.msra.mxu0 %v1601
        %1614 = vmatprep.subr.mxu0 0.0
        %1615 = vmatpush1.msra.mxu0 %v1603
        %1616 = vmatprep.subr.mxu0 0.0
        %1617 = vmatpush1.msra.mxu0 0.0
        %1618 = vmatprep.subr.mxu0 0.0
        %1619 = vmatpush1.msra.mxu0 0.0
        %1620 = vmatprep.subr.mxu0 0.0
        %1621 = vmatpush1.msra.mxu0 0.0
        %1622 = vmatprep.subr.mxu0 0.0
        %1623 = vmatpush1.msra.mxu0 0.0
        %1624 = vmatprep.subr.mxu0 0.0
        %1625 = vmatpush1.msra.mxu0 0.0
        %1626 = vmatprep.subr.mxu0 0.0
        %1627 = vmatpush1.msra.mxu0 0.0
        %1628 = vmatprep.subr.mxu0 0.0
        %1629 = vmatpush1.msra.mxu0 0.0
        %1630 = vmatprep.subr.mxu0 0.0
        %1631 = vmatpush1.msra.mxu0 0.0
        %1632 = vmatprep.subr.mxu0 0.0
        %1633 = vmatpush1.msra.mxu0 0.0
        %1634 = vmatprep.subr.mxu0 0.0
        %1635 = vmatpush1.msra.mxu0 0.0
        %1636 = vmatprep.subr.mxu0 0.0
        %1637 = vmatpush1.msra.mxu0 0.0
        %1638 = vmatprep.subr.mxu0 0.0
        %1639 = vmatpush1.msra.mxu0 0.0
        %1640 = vmatprep.subr.mxu0 0.0
        %1641 = vmatpush1.msra.mxu0 0.0
        %1642 = vmatprep.subr.mxu0 0.0
        %1643 = vmatpush1.msra.mxu0 0.0
        %1644 = vmatprep.subr.mxu0 0.0
        %1645 = vmatpush1.msra.mxu0 0.0
        %1646 = vmatprep.subr.mxu0 0.0
        %1647 = vmatpush1.msra.mxu0 0.0
        %1648 = vmatprep.subr.mxu0 0.0
        %1649 = vmatpush1.msra.mxu0 0.0
        %1650 = vmatprep.subr.mxu0 0.0
        %1651 = vmatpush1.msra.mxu0 0.0
        %1652 = vmatprep.subr.mxu0 0.0
        %1653 = vmatpush1.msra.mxu0 0.0
        %1654 = vmatprep.subr.mxu0 0.0
        %1655 = vmatpush1.msra.mxu0 0.0
        %1656 = vmatprep.subr.mxu0 0.0
        %1657 = vmatpush1.msra.mxu0 0.0
        %1658 = vmatprep.subr.mxu0 0.0
        %1659 = vmatpush1.msra.mxu0 0.0
        %1660 = vmatprep.subr.mxu0 0.0
        %1661 = vmatpush1.msra.mxu0 0.0
        %1662 = vmatprep.subr.mxu0 0.0
        %1663 = vmatpush1.msra.mxu0 0.0
        %1664 = vmatprep.subr.mxu0 0.0
        %1665 = vmatpush1.msra.mxu0 0.0
        %1666 = vmatprep.subr.mxu0 0.0
        %1667 = vmatpush1.msra.mxu0 0.0
        %1668 = vmatprep.subr.mxu0 0.0
        %1669 = vmatpush1.msra.mxu0 0.0
        %1670 = vmatprep.subr.mxu0 0.0
        %1671 = vmatpush1.msra.mxu0 0.0
        %1672 = vmatprep.subr.mxu0 0.0
        %1673 = vmatpush1.msra.mxu0 0.0
        %1674 = vmatprep.subr.mxu0 0.0
        %1675 = vmatpush1.msra.mxu0 0.0
        %1676 = vmatprep.mubr.f32.mxu0 0.0
        %1677 = vmatmul.mubr.f32.gmra.mrb[0].mxu0 %v1607
        %v1678 = vpop.f32.mrb[0].mxu0
        %v1679 = vadd.f32 0.0, %v1678
        %v1680 = vpop.f32.mrb[0].mxu0
        %1681 = vmatprep.mubr.f32.mxu0 0.0
        %1682 = vmatmul.mubr.f32.gmra.mrb[0].mxu0 %v1610
        %v1683 = vpop.f32.mrb[0].mxu0
        %v1684 = vadd.f32 0.0, %v1683
        %v1685 = vpop.f32.mrb[0].mxu0
        %1686 = vdwg.mxu0
        %1689 = vrot.lane.b32.xlu0 %v1279, 8
        %v1690 = vpop.permute.xlu0 %1689
        %1691 = vrot.lane.b32.xlu0 %v1284, 8
        %v1692 = vpop.permute.xlu0 %1691
        %1697 = vrot.lane.b32.xlu0 %v1479, 16
        %v1698 = vpop.permute.xlu0 %1697
        %1699 = vrot.lane.b32.xlu0 %v1484, 16
        %v1700 = vpop.permute.xlu0 %1699
        %1705 = vrot.lane.b32.xlu0 %v1679, 24
        %v1706 = vpop.permute.xlu0 %1705
        %1707 = vrot.lane.b32.xlu0 %v1684, 24
        %v1708 = vpop.permute.xlu0 %1707
        %v1711 = vsel %vm893, %v1079, %v1690
        %v1712 = vsel %vm893, %v1084, %v1692
        %v1713 = vsel %vm977, %v1711, %v1698
        %v1714 = vsel %vm977, %v1712, %v1700
        %vm1715 = vcmask 195584
        %v1716 = vsel %vm1715, %v1713, %v1706
        %v1717 = vsel %vm1715, %v1714, %v1708
        %v1719 = vsel %vm756, %v1716, 0
        %v1722 = vsel %vm756, %v1717, 0
        %1724 = vmatprep.subr.mxu0 0.0
        %1725 = vmatpush1.msra.mxu0 %v725
        %1726 = vmatprep.subr.mxu0 0.0
        %1727 = vmatpush1.msra.mxu0 %v726
        %1728 = vmatprep.subr.mxu0 0.0
        %1729 = vmatpush1.msra.mxu0 %v727
        %1730 = vmatprep.subr.mxu0 0.0
        %1731 = vmatpush1.msra.mxu0 %v728
        %1732 = vmatprep.subr.mxu0 0.0
        %1733 = vmatpush1.msra.mxu0 0.0
        %1734 = vmatprep.subr.mxu0 0.0
        %1735 = vmatpush1.msra.mxu0 0.0
        %1736 = vmatprep.subr.mxu0 0.0
        %1737 = vmatpush1.msra.mxu0 0.0
        %1738 = vmatprep.subr.mxu0 0.0
        %1739 = vmatpush1.msra.mxu0 0.0
        %1740 = vmatprep.subr.mxu0 0.0
        %1741 = vmatpush1.msra.mxu0 0.0
        %1742 = vmatprep.subr.mxu0 0.0
        %1743 = vmatpush1.msra.mxu0 0.0
        %1744 = vmatprep.subr.mxu0 0.0
        %1745 = vmatpush1.msra.mxu0 0.0
        %1746 = vmatprep.subr.mxu0 0.0
        %1747 = vmatpush1.msra.mxu0 0.0
        %1748 = vmatprep.subr.mxu0 0.0
        %1749 = vmatpush1.msra.mxu0 0.0
        %1750 = vmatprep.subr.mxu0 0.0
        %1751 = vmatpush1.msra.mxu0 0.0
        %1752 = vmatprep.subr.mxu0 0.0
        %1753 = vmatpush1.msra.mxu0 0.0
        %1754 = vmatprep.subr.mxu0 0.0
        %1755 = vmatpush1.msra.mxu0 0.0
        %1756 = vmatprep.subr.mxu0 0.0
        %1757 = vmatpush1.msra.mxu0 0.0
        %1758 = vmatprep.subr.mxu0 0.0
        %1759 = vmatpush1.msra.mxu0 0.0
        %1760 = vmatprep.subr.mxu0 0.0
        %1761 = vmatpush1.msra.mxu0 0.0
        %1762 = vmatprep.subr.mxu0 0.0
        %1763 = vmatpush1.msra.mxu0 0.0
        %1764 = vmatprep.subr.mxu0 0.0
        %1765 = vmatpush1.msra.mxu0 0.0
        %1766 = vmatprep.subr.mxu0 0.0
        %1767 = vmatpush1.msra.mxu0 0.0
        %1768 = vmatprep.subr.mxu0 0.0
        %1769 = vmatpush1.msra.mxu0 0.0
        %1770 = vmatprep.subr.mxu0 0.0
        %1771 = vmatpush1.msra.mxu0 0.0
        %1772 = vmatprep.subr.mxu0 0.0
        %1773 = vmatpush1.msra.mxu0 0.0
        %1774 = vmatprep.subr.mxu0 0.0
        %1775 = vmatpush1.msra.mxu0 0.0
        %1776 = vmatprep.subr.mxu0 0.0
        %1777 = vmatpush1.msra.mxu0 0.0
        %1778 = vmatprep.subr.mxu0 0.0
        %1779 = vmatpush1.msra.mxu0 0.0
        %1780 = vmatprep.subr.mxu0 0.0
        %1781 = vmatpush1.msra.mxu0 0.0
        %1782 = vmatprep.subr.mxu0 0.0
        %1783 = vmatpush1.msra.mxu0 0.0
        %1784 = vmatprep.subr.mxu0 0.0
        %1785 = vmatpush1.msra.mxu0 0.0
        %1786 = vmatprep.subr.mxu0 0.0
        %1787 = vmatpush1.msra.mxu0 0.0
        %1788 = vmatprep.mubr.f32.mxu0 0.0
        %1789 = vmatmul.mubr.f32.gmra.mrb[0].mxu0 %v1719
        %v1790 = vpop.f32.mrb[0].mxu0
        %v1791 = vadd.f32 0.0, %v1790
        %v1792 = vpop.f32.mrb[0].mxu0
        %1793 = vmatprep.mubr.f32.mxu0 0.0
        %1794 = vmatmul.mubr.f32.gmra.mrb[0].mxu0 %v1722
        %v1795 = vpop.f32.mrb[0].mxu0
        %v1796 = vadd.f32 0.0, %v1795
        %v1797 = vpop.f32.mrb[0].mxu0
        %1798 = vdwg.mxu0
        %v1799 = vadd.f32 %v754, %v1791
        %v1800 = vadd.f32 %v755, %v1796
        %v1802 = vlaneseq
        %v1803 = vshrl.u32 %v1802, 7
        %v1804 = vsub.s32 0, %v1803
        %v1805 = vrot.slane %v729, %v1804
        %v1807 = vadd.f32 %v1799, %v1805
        %v1808 = vadd.f32 %v1800, %v1805
        %v1809 = vsel %vm756, %v1807, 0.0
        %1810 = vadd.xlane.f32.xlu0 %v1809
        %v1811 = vpop.xlane.xlu0 %1810
        %v1812 = vsel %vm756, %v1808, 0.0
        %1813 = vadd.xlane.f32.xlu0 %v1812
        %v1814 = vpop.xlane.xlu0 %1813
        %v1815 = vmul.f32 %v1811, %v763
        %v1816 = vmul.f32 %v1814, %v763
        %v1817 = vsub.f32 %v1807, %v1815
        %v1818 = vsub.f32 %v1808, %v1816
        %v1819 = vmul.f32 %v1817, %v1817
        %v1820 = vmul.f32 %v1818, %v1818
        %v1821 = vsel %vm756, %v1819, 0.0
        %1822 = vadd.xlane.f32.xlu0 %v1821
        %v1823 = vpop.xlane.xlu0 %1822
        %v1824 = vsel %vm756, %v1820, 0.0
        %1825 = vadd.xlane.f32.xlu0 %v1824
        %v1826 = vpop.xlane.xlu0 %1825
        %v1827 = vmul.f32 %v1823, %v763
        %v1828 = vmul.f32 %v1826, %v763
        %v1829 = vadd.f32 %v1827, 1e-05
        %v1830 = vadd.f32 %v1828, 1e-05
        %v1831 = vrsqrt.pop %v1829
        %v1832 = vrsqrt.pop %v1830
        %v1833 = vmul.f32 %v1817, %v1831
        %v1834 = vmul.f32 %v1818, %v1832
        %v1836 = vlaneseq
        %v1837 = vshrl.u32 %v1836, 7
        %v1838 = vsub.s32 0, %v1837
        %v1839 = vrot.slane %v718, %v1838
        %v1841 = vmul.f32 %v1833, %v1839
        %v1842 = vmul.f32 %v1834, %v1839
        %v1844 = vlaneseq
        %v1845 = vshrl.u32 %v1844, 7
        %v1846 = vsub.s32 0, %v1845
        %v1847 = vrot.slane %v719, %v1846
        %v1849 = vadd.f32 %v1841, %v1847
        %v1850 = vadd.f32 %v1842, %v1847
        %v1852 = vlaneseq
        %v1853 = vshrl.u32 %v1852, 7
        %v1854 = vsub.s32 0, %v1853
        %v1855 = vrot.slane %v734, %v1854
        %v1858 = vsel %vm756, %v1849, 0
        %v1861 = vsel %vm756, %v1850, 0
        %1863 = vmatprep.subr.mxu0 0.0
        %1864 = vmatpush1.msra.mxu0 %v730
        %1865 = vmatprep.subr.mxu0 0.0
        %1866 = vmatpush1.msra.mxu0 %v731
        %1867 = vmatprep.subr.mxu0 0.0
        %1868 = vmatpush1.msra.mxu0 %v732
        %1869 = vmatprep.subr.mxu0 0.0
        %1870 = vmatpush1.msra.mxu0 %v733
        %1871 = vmatprep.subr.mxu0 0.0
        %1872 = vmatpush1.msra.mxu0 0.0
        %1873 = vmatprep.subr.mxu0 0.0
        %1874 = vmatpush1.msra.mxu0 0.0
        %1875 = vmatprep.subr.mxu0 0.0
        %1876 = vmatpush1.msra.mxu0 0.0
        %1877 = vmatprep.subr.mxu0 0.0
        %1878 = vmatpush1.msra.mxu0 0.0
        %1879 = vmatprep.subr.mxu0 0.0
        %1880 = vmatpush1.msra.mxu0 0.0
        %1881 = vmatprep.subr.mxu0 0.0
        %1882 = vmatpush1.msra.mxu0 0.0
        %1883 = vmatprep.subr.mxu0 0.0
        %1884 = vmatpush1.msra.mxu0 0.0
        %1885 = vmatprep.subr.mxu0 0.0
        %1886 = vmatpush1.msra.mxu0 0.0
        %1887 = vmatprep.subr.mxu0 0.0
        %1888 = vmatpush1.msra.mxu0 0.0
        %1889 = vmatprep.subr.mxu0 0.0
        %1890 = vmatpush1.msra.mxu0 0.0
        %1891 = vmatprep.subr.mxu0 0.0
        %1892 = vmatpush1.msra.mxu0 0.0
        %1893 = vmatprep.subr.mxu0 0.0
        %1894 = vmatpush1.msra.mxu0 0.0
        %1895 = vmatprep.subr.mxu0 0.0
        %1896 = vmatpush1.msra.mxu0 0.0
        %1897 = vmatprep.subr.mxu0 0.0
        %1898 = vmatpush1.msra.mxu0 0.0
        %1899 = vmatprep.subr.mxu0 0.0
        %1900 = vmatpush1.msra.mxu0 0.0
        %1901 = vmatprep.subr.mxu0 0.0
        %1902 = vmatpush1.msra.mxu0 0.0
        %1903 = vmatprep.subr.mxu0 0.0
        %1904 = vmatpush1.msra.mxu0 0.0
        %1905 = vmatprep.subr.mxu0 0.0
        %1906 = vmatpush1.msra.mxu0 0.0
        %1907 = vmatprep.subr.mxu0 0.0
        %1908 = vmatpush1.msra.mxu0 0.0
        %1909 = vmatprep.subr.mxu0 0.0
        %1910 = vmatpush1.msra.mxu0 0.0
        %1911 = vmatprep.subr.mxu0 0.0
        %1912 = vmatpush1.msra.mxu0 0.0
        %1913 = vmatprep.subr.mxu0 0.0
        %1914 = vmatpush1.msra.mxu0 0.0
        %1915 = vmatprep.subr.mxu0 0.0
        %1916 = vmatpush1.msra.mxu0 0.0
        %1917 = vmatprep.subr.mxu0 0.0
        %1918 = vmatpush1.msra.mxu0 0.0
        %1919 = vmatprep.subr.mxu0 0.0
        %1920 = vmatpush1.msra.mxu0 0.0
        %1921 = vmatprep.subr.mxu0 0.0
        %1922 = vmatpush1.msra.mxu0 0.0
        %1923 = vmatprep.subr.mxu0 0.0
        %1924 = vmatpush1.msra.mxu0 0.0
        %1925 = vmatprep.subr.mxu0 0.0
        %1926 = vmatpush1.msra.mxu0 0.0
        %1927 = vmatprep.mubr.f32.mxu0 0.0
        %1928 = vmatmul.mubr.f32.gmra.mrb[0].mxu0 %v1858
        %v1929 = vpop.f32.mrb[0].mxu0
        %v1930 = vadd.f32 %v1855, %v1929
        %v1931 = vpop.f32.mrb[0].mxu0
        %1932 = vmatprep.mubr.f32.mxu0 0.0
        %1933 = vmatmul.mubr.f32.gmra.mrb[0].mxu0 %v1861
        %v1934 = vpop.f32.mrb[0].mxu0
        %v1935 = vadd.f32 %v1855, %v1934
        %v1936 = vpop.f32.mrb[0].mxu0
        %1937 = vdwg.mxu0
        %v1938 = vmul.f32 %v1930, 0.5
        %v1939 = vmul.f32 %v1935, 0.5
        %v1940 = vmul.f32 %v1930, 0.70710677
        %v1941 = vmul.f32 %v1935, 0.70710677
        %vm1942 = vcmp.lt.f32.partialorder %v1940, 0.0
        %vm1943 = vcmp.lt.f32.partialorder %v1941, 0.0
        %v1944 = vsel %vm1942, -1.0, 1.0
        %v1945 = vsel %vm1943, -1.0, 1.0
        %v1946 = vand.u32 2147483647, %v1940
        %v1947 = vand.u32 2147483647, %v1941
        %v1948 = vmul.f32 %v1946, 0.3275911
        %v1949 = vmul.f32 %v1947, 0.3275911
        %v1950 = vadd.f32 %v1948, 1.0
        %v1951 = vadd.f32 %v1949, 1.0
        %v1952 = vrcp.pop %v1950
        %v1953 = vmul.f32 1.0, %v1952
        %v1954 = vrcp.pop %v1951
        %v1955 = vmul.f32 1.0, %v1954
        %v1956 = vmul.f32 %v1953, 1.0614054
        %v1957 = vmul.f32 %v1955, 1.0614054
        %v1958 = vadd.f32 %v1956, -1.4531521
        %v1959 = vadd.f32 %v1957, -1.4531521
        %v1960 = vmul.f32 %v1958, %v1953
        %v1961 = vmul.f32 %v1959, %v1955
        %v1962 = vadd.f32 %v1960, 1.4214138
        %v1963 = vadd.f32 %v1961, 1.4214138
        %v1964 = vmul.f32 %v1962, %v1953
        %v1965 = vmul.f32 %v1963, %v1955
        %v1966 = vadd.f32 %v1964, -0.28449672
        %v1967 = vadd.f32 %v1965, -0.28449672
        %v1968 = vmul.f32 %v1966, %v1953
        %v1969 = vmul.f32 %v1967, %v1955
        %v1970 = vadd.f32 %v1968, 0.2548296
        %v1971 = vadd.f32 %v1969, 0.2548296
        %v1972 = vmul.f32 %v1970, %v1953
        %v1973 = vmul.f32 %v1971, %v1955
        %v1974 = vsub.f32 0.0, %v1946
        %v1975 = vsub.f32 0.0, %v1947
        %v1976 = vmul.f32 %v1974, %v1946
        %v1977 = vmul.f32 %v1975, %v1947
        %v1978 = vmul.f32 %v1976, 1.442695
        %v1979 = vpow.pop %v1978
        %v1980 = vmul.f32 %v1977, 1.442695
        %v1981 = vpow.pop %v1980
        %v1982 = vmul.f32 %v1972, %v1979
        %v1983 = vmul.f32 %v1973, %v1981
        %v1984 = vsub.f32 1.0, %v1982
        %v1985 = vsub.f32 1.0, %v1983
        %v1986 = vmul.f32 %v1944, %v1984
        %v1987 = vmul.f32 %v1945, %v1985
        %v1988 = vadd.f32 %v1986, 1.0
        %v1989 = vadd.f32 %v1987, 1.0
        %v1990 = vmul.f32 %v1938, %v1988
        %v1991 = vmul.f32 %v1939, %v1989
        %v1993 = vlaneseq
        %v1994 = vshrl.u32 %v1993, 7
        %v1995 = vsub.s32 0, %v1994
        %v1996 = vrot.slane %v751, %v1995
        %1998 = vmatprep.subr.mxu0 0.0
        %1999 = vmatpush1.msra.mxu0 %v735
        %2000 = vmatprep.subr.mxu0 0.0
        %2001 = vmatpush1.msra.mxu0 %v736
        %2002 = vmatprep.subr.mxu0 0.0
        %2003 = vmatpush1.msra.mxu0 %v737
        %2004 = vmatprep.subr.mxu0 0.0
        %2005 = vmatpush1.msra.mxu0 %v738
        %2006 = vmatprep.subr.mxu0 0.0
        %2007 = vmatpush1.msra.mxu0 %v739
        %2008 = vmatprep.subr.mxu0 0.0
        %2009 = vmatpush1.msra.mxu0 %v740
        %2010 = vmatprep.subr.mxu0 0.0
        %2011 = vmatpush1.msra.mxu0 %v741
        %2012 = vmatprep.subr.mxu0 0.0
        %2013 = vmatpush1.msra.mxu0 %v742
        %2014 = vmatprep.subr.mxu0 0.0
        %2015 = vmatpush1.msra.mxu0 %v743
        %2016 = vmatprep.subr.mxu0 0.0
        %2017 = vmatpush1.msra.mxu0 %v744
        %2018 = vmatprep.subr.mxu0 0.0
        %2019 = vmatpush1.msra.mxu0 %v745
        %2020 = vmatprep.subr.mxu0 0.0
        %2021 = vmatpush1.msra.mxu0 %v746
        %2022 = vmatprep.subr.mxu0 0.0
        %2023 = vmatpush1.msra.mxu0 %v747
        %2024 = vmatprep.subr.mxu0 0.0
        %2025 = vmatpush1.msra.mxu0 %v748
        %2026 = vmatprep.subr.mxu0 0.0
        %2027 = vmatpush1.msra.mxu0 %v749
        %2028 = vmatprep.subr.mxu0 0.0
        %2029 = vmatpush1.msra.mxu0 %v750
        %2030 = vmatprep.subr.mxu0 0.0
        %2031 = vmatpush1.msra.mxu0 0.0
        %2032 = vmatprep.subr.mxu0 0.0
        %2033 = vmatpush1.msra.mxu0 0.0
        %2034 = vmatprep.subr.mxu0 0.0
        %2035 = vmatpush1.msra.mxu0 0.0
        %2036 = vmatprep.subr.mxu0 0.0
        %2037 = vmatpush1.msra.mxu0 0.0
        %2038 = vmatprep.subr.mxu0 0.0
        %2039 = vmatpush1.msra.mxu0 0.0
        %2040 = vmatprep.subr.mxu0 0.0
        %2041 = vmatpush1.msra.mxu0 0.0
        %2042 = vmatprep.subr.mxu0 0.0
        %2043 = vmatpush1.msra.mxu0 0.0
        %2044 = vmatprep.subr.mxu0 0.0
        %2045 = vmatpush1.msra.mxu0 0.0
        %2046 = vmatprep.subr.mxu0 0.0
        %2047 = vmatpush1.msra.mxu0 0.0
        %2048 = vmatprep.subr.mxu0 0.0
        %2049 = vmatpush1.msra.mxu0 0.0
        %2050 = vmatprep.subr.mxu0 0.0
        %2051 = vmatpush1.msra.mxu0 0.0
        %2052 = vmatprep.subr.mxu0 0.0
        %2053 = vmatpush1.msra.mxu0 0.0
        %2054 = vmatprep.subr.mxu0 0.0
        %2055 = vmatpush1.msra.mxu0 0.0
        %2056 = vmatprep.subr.mxu0 0.0
        %2057 = vmatpush1.msra.mxu0 0.0
        %2058 = vmatprep.subr.mxu0 0.0
        %2059 = vmatpush1.msra.mxu0 0.0
        %2060 = vmatprep.subr.mxu0 0.0
        %2061 = vmatpush1.msra.mxu0 0.0
        %2062 = vmatprep.mubr.f32.mxu0 0.0
        %2063 = vmatmul.mubr.f32.gmra.mrb[0].mxu0 %v1990
        %v2064 = vpop.f32.mrb[0].mxu0
        %v2065 = vadd.f32 %v1996, %v2064
        %v2066 = vpop.f32.mrb[0].mxu0
        %2067 = vmatprep.mubr.f32.mxu0 0.0
        %2068 = vmatmul.mubr.f32.gmra.mrb[0].mxu0 %v1991
        %v2069 = vpop.f32.mrb[0].mxu0
        %v2070 = vadd.f32 %v1996, %v2069
        %v2071 = vpop.f32.mrb[0].mxu0
        %2072 = vdwg.mxu0
        %v2073 = vadd.f32 %v1807, %v2065
        %v2074 = vadd.f32 %v1808, %v2070
        %2075 = vst.msk [vmem:[#allocation2] sm:$0xff] %vm756, %v2073
        %2076 = vst.msk [vmem:[#allocation2 + $0x8] sm:$0xff] %vm756, %v2074
        %p2077 = scmp.eq.s32.totalorder %s29, 1
        // Predicated region
        $region93: #{tpu_custom_call.1} parent=87 // pred_check
          %p2078 = pneg %p2077
        $region94: #{tpu_custom_call.1} parent=87 // pred_check_branch
          %2080 = sbr.rel (%p2078) target = $region96
        $region95: #{tpu_custom_call.1} parent=87 // pred_region
          %v2082 = vrot.slane %v2073, 7
          %v2085 = vrot.slane %v2074, 6
          %vm2087 = vcmask 1040384
          %v2088 = vsel %vm2087, %v2082, %v2085
          %v2089 = vld [vmem:[%s14] sm:$0x1]
          %v2090 = vld [vmem:[%s15] sm:$0x1]
          %vm2091 = vcmask 254976
          %v2092 = vsel %vm2091, %v2088, 0.0
          %2093 = vadd.xlane.f32.xlu0 %v2092
          %v2094 = vpop.xlane.xlu0 %2093
          %v2095 = vmul.f32 %v2094, %v763
          %v2096 = vsub.f32 %v2088, %v2095
          %v2097 = vmul.f32 %v2096, %v2096
          %v2098 = vsel %vm2091, %v2097, 0.0
          %2099 = vadd.xlane.f32.xlu0 %v2098
          %v2100 = vpop.xlane.xlu0 %2099
          %v2101 = vmul.f32 %v2100, %v763
          %v2102 = vadd.f32 %v2101, 1e-05
          %v2103 = vrsqrt.pop %v2102
          %v2104 = vmul.f32 %v2096, %v2103
          %v2106 = vlaneseq
          %v2107 = vshrl.u32 %v2106, 7
          %v2108 = vsub.s32 0, %v2107
          %v2109 = vrot.slane %v2089, %v2108
          %v2111 = vmul.f32 %v2104, %v2109
          %v2113 = vlaneseq
          %v2114 = vshrl.u32 %v2113, 7
          %v2115 = vsub.s32 0, %v2114
          %v2116 = vrot.slane %v2090, %v2115
          %v2118 = vadd.f32 %v2111, %v2116
          %v2119 = vld [vmem:[%s16] sm:$0xff]
          %v2120 = vld [vmem:[%s16 + $0x8] sm:$0xff]
          %v2121 = vld [vmem:[%s16 + $0x10] sm:$0xff]
          %v2122 = vld [vmem:[%s16 + $0x18] sm:$0xff]
          %v2124 = vsel %vm756, %v2118, 0
          %2126 = vmatprep.subr.mxu0 0.0
          %2127 = vmatpush1.msra.mxu0 %v2119
          %2128 = vmatprep.subr.mxu0 0.0
          %2129 = vmatpush1.msra.mxu0 %v2120
          %2130 = vmatprep.subr.mxu0 0.0
          %2131 = vmatpush1.msra.mxu0 %v2121
          %2132 = vmatprep.subr.mxu0 0.0
          %2133 = vmatpush1.msra.mxu0 %v2122
          %2134 = vmatprep.subr.mxu0 0.0
          %2135 = vmatpush1.msra.mxu0 0.0
          %2136 = vmatprep.subr.mxu0 0.0
          %2137 = vmatpush1.msra.mxu0 0.0
          %2138 = vmatprep.subr.mxu0 0.0
          %2139 = vmatpush1.msra.mxu0 0.0
          %2140 = vmatprep.subr.mxu0 0.0
          %2141 = vmatpush1.msra.mxu0 0.0
          %2142 = vmatprep.subr.mxu0 0.0
          %2143 = vmatpush1.msra.mxu0 0.0
          %2144 = vmatprep.subr.mxu0 0.0
          %2145 = vmatpush1.msra.mxu0 0.0
          %2146 = vmatprep.subr.mxu0 0.0
          %2147 = vmatpush1.msra.mxu0 0.0
          %2148 = vmatprep.subr.mxu0 0.0
          %2149 = vmatpush1.msra.mxu0 0.0
          %2150 = vmatprep.subr.mxu0 0.0
          %2151 = vmatpush1.msra.mxu0 0.0
          %2152 = vmatprep.subr.mxu0 0.0
          %2153 = vmatpush1.msra.mxu0 0.0
          %2154 = vmatprep.subr.mxu0 0.0
          %2155 = vmatpush1.msra.mxu0 0.0
          %2156 = vmatprep.subr.mxu0 0.0
          %2157 = vmatpush1.msra.mxu0 0.0
          %2158 = vmatprep.subr.mxu0 0.0
          %2159 = vmatpush1.msra.mxu0 0.0
          %2160 = vmatprep.subr.mxu0 0.0
          %2161 = vmatpush1.msra.mxu0 0.0
          %2162 = vmatprep.subr.mxu0 0.0
          %2163 = vmatpush1.msra.mxu0 0.0
          %2164 = vmatprep.subr.mxu0 0.0
          %2165 = vmatpush1.msra.mxu0 0.0
          %2166 = vmatprep.subr.mxu0 0.0
          %2167 = vmatpush1.msra.mxu0 0.0
          %2168 = vmatprep.subr.mxu0 0.0
          %2169 = vmatpush1.msra.mxu0 0.0
          %2170 = vmatprep.subr.mxu0 0.0
          %2171 = vmatpush1.msra.mxu0 0.0
          %2172 = vmatprep.subr.mxu0 0.0
          %2173 = vmatpush1.msra.mxu0 0.0
          %2174 = vmatprep.subr.mxu0 0.0
          %2175 = vmatpush1.msra.mxu0 0.0
          %2176 = vmatprep.subr.mxu0 0.0
          %2177 = vmatpush1.msra.mxu0 0.0
          %2178 = vmatprep.subr.mxu0 0.0
          %2179 = vmatpush1.msra.mxu0 0.0
          %2180 = vmatprep.subr.mxu0 0.0
          %2181 = vmatpush1.msra.mxu0 0.0
          %2182 = vmatprep.subr.mxu0 0.0
          %2183 = vmatpush1.msra.mxu0 0.0
          %2184 = vmatprep.subr.mxu0 0.0
          %2185 = vmatpush1.msra.mxu0 0.0
          %2186 = vmatprep.subr.mxu0 0.0
          %2187 = vmatpush1.msra.mxu0 0.0
          %2188 = vmatprep.subr.mxu0 0.0
          %2189 = vmatpush1.msra.mxu0 0.0
          %2190 = vmatprep.mubr.f32.mxu0 0.0
          %2191 = vmatmul.mubr.f32.gmra.mrb[0].mxu0 %v2124
          %v2192 = vpop.f32.mrb[0].mxu0
          %v2193 = vadd.f32 0.0, %v2192
          %v2194 = vpop.f32.mrb[0].mxu0
          %2195 = vdwg.mxu0
          %2196 = vst [vmem:[#allocation3] sm:$0x3] %v2193
        $region96: #{tpu_custom_call.1} parent=87 // pred_fallthru
          _
        // Predicated region
        $region97: #{tpu_custom_call.1} parent=87 // pred_check
          %p2197 = pneg %p459
        $region98: #{tpu_custom_call.1} parent=87 // pred_check_branch
          %2199 = sbr.rel (%p2197) target = $region100
        $region99: #{tpu_custom_call.1} parent=87 // pred_region
          %s2201 = ssub.s32 32, 32
          %2202 = vsyncadd [#allocation4], %s2201
          %s2204 = sshll.u32 [#allocation3], 4
          %s2205 = int_to_ptr.vmem [resolvable:$true] %s2204
          %2207 = dma.vmem_to_hbm [thread:$0]  %s2205, 32, %s17, [#allocation4]
        $region100: #{tpu_custom_call.1} parent=87 // pred_fallthru
          _
        // Predicated region
        $region101: #{tpu_custom_call.1} parent=87 // pred_check
          %p2208 = pneg %p459
        $region102: #{tpu_custom_call.1} parent=87 // pred_check_branch
          %2210 = sbr.rel (%p2208) target = $region104
        $region103: #{tpu_custom_call.1} parent=87 // pred_region
          %2211 = dma.done [#allocation4], 32
        $region104: #{tpu_custom_call.1} parent=87 // pred_fallthru
          _
      $region88: #{tpu_custom_call.1} parent=5 // pred_fallthru
        _
      %p2212 = scmp.le.s32.totalorder 2, %s24
      // Predicated region
      $region105: #{tpu_custom_call.1} parent=5 // pred_check
        %p2213 = pneg %p2212
      $region106: #{tpu_custom_call.1} parent=5 // pred_check_branch
        %2215 = sbr.rel (%p2213) target = $region108
      $region107: #{tpu_custom_call.1} parent=5 // pred_region
        %s2216 = ssub.s32 %s24, 2
      $region108: #{tpu_custom_call.1} parent=5 // pred_fallthru
        _
    $region6: #{tpu_custom_call.1} parent=1 // loop_footer
      %s28 = sadd.s32 1, %s24
    $region7: #{tpu_custom_call.1} parent=1 // loop_footer_branch
      %23 = sbr.rel target = $region3
    $region8: #{tpu_custom_call.1} parent=1 // loop_exit
      _
    %2217 = vsyncpa [#allocation4], 1
    %s2218 = scalar_lea.sflag [#allocation4], 1
    %2219 = vsyncpa %s2218, 1

</llo_original>
